<compile_context>
chip_gen: v5e
topology: v5e:2x2
jax: 0.10.0
libtpu: 0.0.40
codegen_flags: <defaults>
</compile_context>

<pallas_src>
import functools

import jax
import jax.numpy as jnp
from jax.experimental import pallas as pl
from jax.experimental.pallas import tpu as pltpu


INPUT_SIZE = 784
HIDDEN_SIZES = [512, 256, 256, 128]
NUM_CLASSES = 10
LAYER_SIZES = [INPUT_SIZE] + HIDDEN_SIZES + [NUM_CLASSES]
NUM_LAYERS = len(LAYER_SIZES) - 1  # 5 Linear layers

LANE = 128
PADDED_OUT = 128                              # last layer: 10 -> 128 (lane-dense stores)
OUT_DIMS = HIDDEN_SIZES + [PADDED_OUT]        # per-layer output widths inside the kernel
BIAS_ROWS = 8                                 # 5 layers padded to a full sublane tile
BIAS_COLS = max(max(HIDDEN_SIZES), PADDED_OUT)  # 512


def _round_up(x, m):
    return (x + m - 1) // m * m


def _mlp_kernel(x_ref, *refs):
    """Fused MLP forward for one batch tile.

    refs = (w1, w2, w3, w4, w5_padded, bias_table, out_ref)
      x_ref        : (B_TILE, 784) bf16
      w{i}         : (in_i, out_i) bf16, resident in VMEM across the grid
      bias_table   : (8, 512) f32, row l holds layer l's bias (zero padded)
      out_ref      : (B_TILE, 128) f32 (only first 10 columns meaningful)
    """
    out_ref = refs[-1]
    bias_ref = refs[-2]
    w_refs = refs[:-2]

    h = x_ref[...]  # bf16 activations
    for layer in range(NUM_LAYERS):
        out_dim = OUT_DIMS[layer]
        w = w_refs[layer][...]                         # bf16 (in, out_dim)
        b = bias_ref[layer:layer + 1, :out_dim]        # f32  (1, out_dim)
        acc = jnp.dot(h, w, preferred_element_type=jnp.float32) + b
        if layer < NUM_LAYERS - 1:
            # act_fn: ReLU (concrete choice for the act_fn constructor arg).
            acc = jnp.maximum(acc, 0.0)
            h = acc.astype(jnp.bfloat16)
        else:
            out_ref[...] = acc.astype(out_ref.dtype)


@functools.partial(jax.jit, static_argnames=("block_b",))
def base_network_forward(x, params, *, block_b=512):
    """x: (B, C, H, W) or (B, 784); params: list of 5 (W_(in,out), b_(out,)) pairs."""
    batch = x.shape[0]
    x2d = x.reshape(batch, -1).astype(jnp.bfloat16)  # x.view(x.size(0), -1)
    assert x2d.shape[1] == INPUT_SIZE

    # Batch tile: multiple of 16 (bf16 sublane packing), capped at block_b.
    b_tile = min(block_b, _round_up(batch, 16))
    padded_b = _round_up(batch, b_tile)
    if padded_b != batch:
        x2d = jnp.pad(x2d, ((0, padded_b - batch), (0, 0)))

    # Weights -> bf16 (last layer zero-padded to 128 cols); biases fused into
    # one (8, 512) f32 table so they arrive as a single VMEM operand.
    weights = []
    bias_tbl = jnp.zeros((BIAS_ROWS, BIAS_COLS), jnp.float32)
    for i, (w, b) in enumerate(params):
        w = w.astype(jnp.bfloat16)
        b = b.astype(jnp.float32)
        if i == NUM_LAYERS - 1:
            w = jnp.pad(w, ((0, 0), (0, PADDED_OUT - NUM_CLASSES)))
            b = jnp.pad(b, (0, PADDED_OUT - NUM_CLASSES))
        bias_tbl = bias_tbl.at[i, : b.shape[0]].set(b)
        weights.append(w)

    grid = (padded_b // b_tile,)

    in_specs = [pl.BlockSpec((b_tile, INPUT_SIZE), lambda i: (i, 0))]
    # Constant index_map: parameters DMA'd once, stay resident across batch tiles.
    for w in weights:
        in_specs.append(pl.BlockSpec(w.shape, lambda i: (0, 0)))
    in_specs.append(pl.BlockSpec((BIAS_ROWS, BIAS_COLS), lambda i: (0, 0)))

    out_specs = pl.BlockSpec((b_tile, PADDED_OUT), lambda i: (i, 0))

    out_padded = pl.pallas_call(
        _mlp_kernel,
        out_shape=jax.ShapeDtypeStruct((padded_b, PADDED_OUT), jnp.float32),
        grid=grid,
        in_specs=in_specs,
        out_specs=out_specs,
        compiler_params=pltpu.CompilerParams(
            dimension_semantics=("parallel",),   # shards batch tiles across TCs on v7x
            vmem_limit_bytes=48 << 20,           # headroom for v7x's 64 MiB VMEM
        ),
    )(x2d, *weights, bias_tbl)

    return out_padded[:batch, :NUM_CLASSES]


def init_params(key):
    """Deterministic PyTorch-Linear-style init (Kaiming-uniform-ish), stored (in, out)."""
    params = []
    for i in range(NUM_LAYERS):
        fan_in, fan_out = LAYER_SIZES[i], LAYER_SIZES[i + 1]
        key, wk, bk = jax.random.split(key, 3)
        bound = 1.0 / jnp.sqrt(fan_in)
        w = jax.random.uniform(wk, (fan_in, fan_out), jnp.float32, -bound, bound)
        b = jax.random.uniform(bk, (fan_out,), jnp.float32, -bound, bound)
        params.append((w, b))
    return params


def _reference_forward(x, params):
    """Same math as the kernel (bf16 operands, f32 accumulation) in plain JAX."""
    h = x.reshape(x.shape[0], -1).astype(jnp.bfloat16)
    out = None
    for i, (w, b) in enumerate(params):
        acc = jnp.dot(h, w.astype(jnp.bfloat16),
                      preferred_element_type=jnp.float32) + b.astype(jnp.float32)
        if i < NUM_LAYERS - 1:
            h = jnp.maximum(acc, 0.0).astype(jnp.bfloat16)
        else:
            out = acc
    return out


if __name__ == "__main__":
    key = jax.random.PRNGKey(0)
    pkey, xkey = jax.random.split(key)

    params = init_params(pkey)
    # NCHW input, flattened to 784 features per sample inside the wrapper.
    x = jax.random.normal(xkey, (8, 1, 28, 28), jnp.float32)

    out = base_network_forward(x, params)
    out = jax.block_until_ready(out)

    ref = _reference_forward(x, params)
    assert out.shape == (8, NUM_CLASSES)
    assert jnp.allclose(out, ref, atol=2e-2, rtol=2e-2)

    print("KERNEL_OK")
</pallas_src>

<mosaic_0001>
module attributes {stable_mosaic.version = 11 : i64} {
  func.func @_mlp_kernel(%arg0: i32, %arg1: memref<16x784xbf16, #tpu.memory_space<vmem>>, %arg2: memref<784x512xbf16, #tpu.memory_space<vmem>>, %arg3: memref<512x256xbf16, #tpu.memory_space<vmem>>, %arg4: memref<256x256xbf16, #tpu.memory_space<vmem>>, %arg5: memref<256x128xbf16, #tpu.memory_space<vmem>>, %arg6: memref<128x128xbf16, #tpu.memory_space<vmem>>, %arg7: memref<8x512xf32, #tpu.memory_space<vmem>>, %arg8: memref<16x128xf32, #tpu.memory_space<vmem>>) attributes {dimension_semantics = [#tpu.dimension_semantics<parallel>], iteration_bounds = array<i64: 1>, scalar_prefetch = 0 : i64, scratch_operands = 0 : i64, tpu.core_type = #tpu.core_type<tc>, window_params = [{transform_indices = @transform_0, window_bounds = array<i64: 16, 784>}, {pipeline_mode = #tpu.pipeline_mode<synchronous>, transform_indices = @transform_1, window_bounds = array<i64: 784, 512>}, {pipeline_mode = #tpu.pipeline_mode<synchronous>, transform_indices = @transform_2, window_bounds = array<i64: 512, 256>}, {pipeline_mode = #tpu.pipeline_mode<synchronous>, transform_indices = @transform_3, window_bounds = array<i64: 256, 256>}, {pipeline_mode = #tpu.pipeline_mode<synchronous>, transform_indices = @transform_4, window_bounds = array<i64: 256, 128>}, {pipeline_mode = #tpu.pipeline_mode<synchronous>, transform_indices = @transform_5, window_bounds = array<i64: 128, 128>}, {pipeline_mode = #tpu.pipeline_mode<synchronous>, transform_indices = @transform_6, window_bounds = array<i64: 8, 512>}, {transform_indices = @transform_7, window_bounds = array<i64: 16, 128>}]} {
    %c0 = arith.constant 0 : index
    %c0_0 = arith.constant 0 : index
    %0 = vector.load %arg1[%c0, %c0_0] : memref<16x784xbf16, #tpu.memory_space<vmem>>, vector<16x784xbf16>
    %c0_1 = arith.constant 0 : index
    %c0_2 = arith.constant 0 : index
    %1 = vector.load %arg2[%c0_1, %c0_2] : memref<784x512xbf16, #tpu.memory_space<vmem>>, vector<784x512xbf16>
    %c0_3 = arith.constant 0 : index
    %c0_4 = arith.constant 0 : index
    %2 = vector.load %arg7[%c0_3, %c0_4] : memref<8x512xf32, #tpu.memory_space<vmem>>, vector<1x512xf32>
    %cst = arith.constant dense<0.000000e+00> : vector<16x512xf32>
    %3 = tpu.matmul %0, %1, %cst {dimension_numbers = #tpu.dot_dimension_numbers<[1], [0], [0], [1], [0, 0, 1, 1], [], []>} : vector<16x784xbf16>, vector<784x512xbf16>, vector<16x512xf32> -> vector<16x512xf32>
    %4 = vector.broadcast %2 : vector<1x512xf32> to vector<16x512xf32>
    %5 = arith.addf %3, %4 : vector<16x512xf32>
    %cst_5 = arith.constant 0.000000e+00 : f32
    %6 = vector.broadcast %cst_5 : f32 to vector<16x512xf32>
    %7 = arith.maximumf %5, %6 : vector<16x512xf32>
    %8 = arith.truncf %7 : vector<16x512xf32> to vector<16x512xbf16>
    %c0_6 = arith.constant 0 : index
    %c0_7 = arith.constant 0 : index
    %9 = vector.load %arg3[%c0_6, %c0_7] : memref<512x256xbf16, #tpu.memory_space<vmem>>, vector<512x256xbf16>
    %c1 = arith.constant 1 : index
    %c0_8 = arith.constant 0 : index
    %10 = vector.load %arg7[%c1, %c0_8] : memref<8x512xf32, #tpu.memory_space<vmem>>, vector<1x256xf32>
    %cst_9 = arith.constant dense<0.000000e+00> : vector<16x256xf32>
    %11 = tpu.matmul %8, %9, %cst_9 {dimension_numbers = #tpu.dot_dimension_numbers<[1], [0], [0], [1], [0, 0, 1, 1], [], []>} : vector<16x512xbf16>, vector<512x256xbf16>, vector<16x256xf32> -> vector<16x256xf32>
    %12 = vector.broadcast %10 : vector<1x256xf32> to vector<16x256xf32>
    %13 = arith.addf %11, %12 : vector<16x256xf32>
    %cst_10 = arith.constant 0.000000e+00 : f32
    %14 = vector.broadcast %cst_10 : f32 to vector<16x256xf32>
    %15 = arith.maximumf %13, %14 : vector<16x256xf32>
    %16 = arith.truncf %15 : vector<16x256xf32> to vector<16x256xbf16>
    %c0_11 = arith.constant 0 : index
    %c0_12 = arith.constant 0 : index
    %17 = vector.load %arg4[%c0_11, %c0_12] : memref<256x256xbf16, #tpu.memory_space<vmem>>, vector<256x256xbf16>
    %c2 = arith.constant 2 : index
    %c0_13 = arith.constant 0 : index
    %18 = vector.load %arg7[%c2, %c0_13] : memref<8x512xf32, #tpu.memory_space<vmem>>, vector<1x256xf32>
    %cst_14 = arith.constant dense<0.000000e+00> : vector<16x256xf32>
    %19 = tpu.matmul %16, %17, %cst_14 {dimension_numbers = #tpu.dot_dimension_numbers<[1], [0], [0], [1], [0, 0, 1, 1], [], []>} : vector<16x256xbf16>, vector<256x256xbf16>, vector<16x256xf32> -> vector<16x256xf32>
    %20 = vector.broadcast %18 : vector<1x256xf32> to vector<16x256xf32>
    %21 = arith.addf %19, %20 : vector<16x256xf32>
    %cst_15 = arith.constant 0.000000e+00 : f32
    %22 = vector.broadcast %cst_15 : f32 to vector<16x256xf32>
    %23 = arith.maximumf %21, %22 : vector<16x256xf32>
    %24 = arith.truncf %23 : vector<16x256xf32> to vector<16x256xbf16>
    %c0_16 = arith.constant 0 : index
    %c0_17 = arith.constant 0 : index
    %25 = vector.load %arg5[%c0_16, %c0_17] : memref<256x128xbf16, #tpu.memory_space<vmem>>, vector<256x128xbf16>
    %c3 = arith.constant 3 : index
    %c0_18 = arith.constant 0 : index
    %26 = vector.load %arg7[%c3, %c0_18] : memref<8x512xf32, #tpu.memory_space<vmem>>, vector<1x128xf32>
    %cst_19 = arith.constant dense<0.000000e+00> : vector<16x128xf32>
    %27 = tpu.matmul %24, %25, %cst_19 {dimension_numbers = #tpu.dot_dimension_numbers<[1], [0], [0], [1], [0, 0, 1, 1], [], []>} : vector<16x256xbf16>, vector<256x128xbf16>, vector<16x128xf32> -> vector<16x128xf32>
    %28 = vector.broadcast %26 : vector<1x128xf32> to vector<16x128xf32>
    %29 = arith.addf %27, %28 : vector<16x128xf32>
    %cst_20 = arith.constant 0.000000e+00 : f32
    %30 = vector.broadcast %cst_20 : f32 to vector<16x128xf32>
    %31 = arith.maximumf %29, %30 : vector<16x128xf32>
    %32 = arith.truncf %31 : vector<16x128xf32> to vector<16x128xbf16>
    %c0_21 = arith.constant 0 : index
    %c0_22 = arith.constant 0 : index
    %33 = vector.load %arg6[%c0_21, %c0_22] : memref<128x128xbf16, #tpu.memory_space<vmem>>, vector<128x128xbf16>
    %c4 = arith.constant 4 : index
    %c0_23 = arith.constant 0 : index
    %34 = vector.load %arg7[%c4, %c0_23] : memref<8x512xf32, #tpu.memory_space<vmem>>, vector<1x128xf32>
    %cst_24 = arith.constant dense<0.000000e+00> : vector<16x128xf32>
    %35 = tpu.matmul %32, %33, %cst_24 {dimension_numbers = #tpu.dot_dimension_numbers<[1], [0], [0], [1], [0, 0, 1, 1], [], []>} : vector<16x128xbf16>, vector<128x128xbf16>, vector<16x128xf32> -> vector<16x128xf32>
    %36 = vector.broadcast %34 : vector<1x128xf32> to vector<16x128xf32>
    %37 = arith.addf %35, %36 : vector<16x128xf32>
    %c0_25 = arith.constant 0 : index
    %c0_26 = arith.constant 0 : index
    %38 = vector.load %arg8[%c0_25, %c0_26] : memref<16x128xf32, #tpu.memory_space<vmem>>, vector<16x128xf32>
    tpu.vector_store %arg8[%c0_25, %c0_26], %37 {strides = array<i32>} : memref<16x128xf32, #tpu.memory_space<vmem>>, vector<16x128xf32>,
    return
  }
  func.func @transform_0(%arg0: i32) -> (i32, i32) {
    %c0_i32 = arith.constant 0 : i32
    %c0_i32_0 = arith.constant 0 : i32
    return %arg0, %c0_i32 : i32, i32
  }
  func.func @transform_1(%arg0: i32) -> (i32, i32) {
    %c0_i32 = arith.constant 0 : i32
    %c0_i32_0 = arith.constant 0 : i32
    %c0_i32_1 = arith.constant 0 : i32
    return %c0_i32, %c0_i32_0 : i32, i32
  }
  func.func @transform_2(%arg0: i32) -> (i32, i32) {
    %c0_i32 = arith.constant 0 : i32
    %c0_i32_0 = arith.constant 0 : i32
    %c0_i32_1 = arith.constant 0 : i32
    return %c0_i32, %c0_i32_0 : i32, i32
  }
  func.func @transform_3(%arg0: i32) -> (i32, i32) {
    %c0_i32 = arith.constant 0 : i32
    %c0_i32_0 = arith.constant 0 : i32
    %c0_i32_1 = arith.constant 0 : i32
    return %c0_i32, %c0_i32_0 : i32, i32
  }
  func.func @transform_4(%arg0: i32) -> (i32, i32) {
    %c0_i32 = arith.constant 0 : i32
    %c0_i32_0 = arith.constant 0 : i32
    %c0_i32_1 = arith.constant 0 : i32
    return %c0_i32, %c0_i32_0 : i32, i32
  }
  func.func @transform_5(%arg0: i32) -> (i32, i32) {
    %c0_i32 = arith.constant 0 : i32
    %c0_i32_0 = arith.constant 0 : i32
    %c0_i32_1 = arith.constant 0 : i32
    return %c0_i32, %c0_i32_0 : i32, i32
  }
  func.func @transform_6(%arg0: i32) -> (i32, i32) {
    %c0_i32 = arith.constant 0 : i32
    %c0_i32_0 = arith.constant 0 : i32
    %c0_i32_1 = arith.constant 0 : i32
    return %c0_i32, %c0_i32_0 : i32, i32
  }
  func.func @transform_7(%arg0: i32) -> (i32, i32) {
    %c0_i32 = arith.constant 0 : i32
    %c0_i32_0 = arith.constant 0 : i32
    return %arg0, %c0_i32 : i32, i32
  }
}

</mosaic_0001>

<llo_original>
// kernel: base_network_forward.1
$region0: #{base_network_forward.1}
  #allocation0 [shape = 'u32[]', space=smem, size = 0x4, offset = 0x4, fixed_abs, tag = 'smem constant byte address 0x4 - core index']
  #allocation1 [shape = 'u32[72,128]{1,0:T(1,128)}', space=vmem, size = 0x9000, scoped, tag = 'internal scratch']
  %s0 = inlined_call_operand.vmem [shape: bf16[16,784], index: 0, kind: input, shape index: {}]
  %s1 = inlined_call_operand.vmem [shape: bf16[784,512], index: 1, kind: input, shape index: {}]
  %s2 = inlined_call_operand.vmem [shape: bf16[512,256], index: 2, kind: input, shape index: {}]
  %s3 = inlined_call_operand.vmem [shape: bf16[256,256], index: 3, kind: input, shape index: {}]
  %s4 = inlined_call_operand.vmem [shape: bf16[256,128], index: 4, kind: input, shape index: {}]
  %s5 = inlined_call_operand.vmem [shape: bf16[128,128], index: 5, kind: input, shape index: {}]
  %s6 = inlined_call_operand.vmem [shape: f32[8,512], index: 6, kind: input, shape index: {}]
  %s7 = inlined_call_operand.vmem [shape: f32[16,128], index: 7, kind: output, shape index: {}]
  %s8 = sld [smem:[#allocation0]]
  $region38: #{base_network_forward.1} parent=0
    _
  %s10 = ssub.s32 1, %s8
  %s11 = scalar_select 0, %s10, %s8
  // Predicated region
  $region2: #{base_network_forward.1} parent=0 // pred_check
    _
  $region3: #{base_network_forward.1} parent=0 // pred_check_branch
    %13 = sbr.rel (0) target = $region5
  $region4: #{base_network_forward.1} parent=0 // pred_region
    _
  $region5: #{base_network_forward.1} parent=0 // pred_fallthru
    _
  // Predicated region
  $region6: #{base_network_forward.1} parent=0 // pred_check
    _
  $region7: #{base_network_forward.1} parent=0 // pred_check_branch
    %15 = sbr.rel (0) target = $region9
  $region8: #{base_network_forward.1} parent=0 // pred_region
    _
  $region9: #{base_network_forward.1} parent=0 // pred_fallthru
    _
  // Predicated region
  $region10: #{base_network_forward.1} parent=0 // pred_check
    _
  $region11: #{base_network_forward.1} parent=0 // pred_check_branch
    %17 = sbr.rel (0) target = $region13
  $region12: #{base_network_forward.1} parent=0 // pred_region
    _
  $region13: #{base_network_forward.1} parent=0 // pred_fallthru
    _
  // Predicated region
  $region14: #{base_network_forward.1} parent=0 // pred_check
    _
  $region15: #{base_network_forward.1} parent=0 // pred_check_branch
    %19 = sbr.rel (0) target = $region17
  $region16: #{base_network_forward.1} parent=0 // pred_region
    _
  $region17: #{base_network_forward.1} parent=0 // pred_fallthru
    _
  // Predicated region
  $region18: #{base_network_forward.1} parent=0 // pred_check
    _
  $region19: #{base_network_forward.1} parent=0 // pred_check_branch
    %21 = sbr.rel (0) target = $region21
  $region20: #{base_network_forward.1} parent=0 // pred_region
    _
  $region21: #{base_network_forward.1} parent=0 // pred_fallthru
    _
  // Predicated region
  $region22: #{base_network_forward.1} parent=0 // pred_check
    _
  $region23: #{base_network_forward.1} parent=0 // pred_check_branch
    %23 = sbr.rel (0) target = $region25
  $region24: #{base_network_forward.1} parent=0 // pred_region
    _
  $region25: #{base_network_forward.1} parent=0 // pred_fallthru
    _
  // Predicated region
  $region26: #{base_network_forward.1} parent=0 // pred_check
    _
  $region27: #{base_network_forward.1} parent=0 // pred_check_branch
    %25 = sbr.rel (0) target = $region29
  $region28: #{base_network_forward.1} parent=0 // pred_region
    _
  $region29: #{base_network_forward.1} parent=0 // pred_fallthru
    _
  %v27 = vld [vmem:[%s0] sm:$0xff]
  %v28 = vld [vmem:[%s0 + $0x8] sm:$0xff]
  %v29 = vld [vmem:[%s0 + $0x10] sm:$0xff]
  %v30 = vld [vmem:[%s0 + $0x18] sm:$0xf]
  %v31 = vld [vmem:[%s0 + $0x1c] sm:$0xff]
  %v32 = vld [vmem:[%s0 + $0x24] sm:$0xff]
  %v33 = vld [vmem:[%s0 + $0x2c] sm:$0xff]
  %v34 = vld [vmem:[%s0 + $0x34] sm:$0xf]
  %v35 = vld [vmem:[%s1] sm:$0xff]
  %v36 = vld [vmem:[%s1 + $0x8] sm:$0xff]
  %v37 = vld [vmem:[%s1 + $0x10] sm:$0xff]
  %v38 = vld [vmem:[%s1 + $0x18] sm:$0xff]
  %v39 = vld [vmem:[%s1 + $0x20] sm:$0xff]
  %v40 = vld [vmem:[%s1 + $0x28] sm:$0xff]
  %v41 = vld [vmem:[%s1 + $0x30] sm:$0xff]
  %v42 = vld [vmem:[%s1 + $0x38] sm:$0xff]
  %v43 = vld [vmem:[%s1 + $0x40] sm:$0xff]
  %v44 = vld [vmem:[%s1 + $0x48] sm:$0xff]
  %v45 = vld [vmem:[%s1 + $0x50] sm:$0xff]
  %v46 = vld [vmem:[%s1 + $0x58] sm:$0xff]
  %v47 = vld [vmem:[%s1 + $0x60] sm:$0xff]
  %v48 = vld [vmem:[%s1 + $0x68] sm:$0xff]
  %v49 = vld [vmem:[%s1 + $0x70] sm:$0xff]
  %v50 = vld [vmem:[%s1 + $0x78] sm:$0xff]
  %v51 = vld [vmem:[%s1 + $0x80] sm:$0xff]
  %v52 = vld [vmem:[%s1 + $0x88] sm:$0xff]
  %v53 = vld [vmem:[%s1 + $0x90] sm:$0xff]
  %v54 = vld [vmem:[%s1 + $0x98] sm:$0xff]
  %v55 = vld [vmem:[%s1 + $0xa0] sm:$0xff]
  %v56 = vld [vmem:[%s1 + $0xa8] sm:$0xff]
  %v57 = vld [vmem:[%s1 + $0xb0] sm:$0xff]
  %v58 = vld [vmem:[%s1 + $0xb8] sm:$0xff]
  %v59 = vld [vmem:[%s1 + $0xc0] sm:$0xff]
  %v60 = vld [vmem:[%s1 + $0xc8] sm:$0xff]
  %v61 = vld [vmem:[%s1 + $0xd0] sm:$0xff]
  %v62 = vld [vmem:[%s1 + $0xd8] sm:$0xff]
  %v63 = vld [vmem:[%s1 + $0xe0] sm:$0xff]
  %v64 = vld [vmem:[%s1 + $0xe8] sm:$0xff]
  %v65 = vld [vmem:[%s1 + $0xf0] sm:$0xff]
  %v66 = vld [vmem:[%s1 + $0xf8] sm:$0xff]
  %v67 = vld [vmem:[%s1 + $0x100] sm:$0xff]
  %v68 = vld [vmem:[%s1 + $0x108] sm:$0xff]
  %v69 = vld [vmem:[%s1 + $0x110] sm:$0xff]
  %v70 = vld [vmem:[%s1 + $0x118] sm:$0xff]
  %v71 = vld [vmem:[%s1 + $0x120] sm:$0xff]
  %v72 = vld [vmem:[%s1 + $0x128] sm:$0xff]
  %v73 = vld [vmem:[%s1 + $0x130] sm:$0xff]
  %v74 = vld [vmem:[%s1 + $0x138] sm:$0xff]
  %v75 = vld [vmem:[%s1 + $0x140] sm:$0xff]
  %v76 = vld [vmem:[%s1 + $0x148] sm:$0xff]
  %v77 = vld [vmem:[%s1 + $0x150] sm:$0xff]
  %v78 = vld [vmem:[%s1 + $0x158] sm:$0xff]
  %v79 = vld [vmem:[%s1 + $0x160] sm:$0xff]
  %v80 = vld [vmem:[%s1 + $0x168] sm:$0xff]
  %v81 = vld [vmem:[%s1 + $0x170] sm:$0xff]
  %v82 = vld [vmem:[%s1 + $0x178] sm:$0xff]
  %v83 = vld [vmem:[%s1 + $0x180] sm:$0xff]
  %v84 = vld [vmem:[%s1 + $0x188] sm:$0xff]
  %v85 = vld [vmem:[%s1 + $0x190] sm:$0xff]
  %v86 = vld [vmem:[%s1 + $0x198] sm:$0xff]
  %v87 = vld [vmem:[%s1 + $0x1a0] sm:$0xff]
  %v88 = vld [vmem:[%s1 + $0x1a8] sm:$0xff]
  %v89 = vld [vmem:[%s1 + $0x1b0] sm:$0xff]
  %v90 = vld [vmem:[%s1 + $0x1b8] sm:$0xff]
  %v91 = vld [vmem:[%s1 + $0x1c0] sm:$0xff]
  %v92 = vld [vmem:[%s1 + $0x1c8] sm:$0xff]
  %v93 = vld [vmem:[%s1 + $0x1d0] sm:$0xff]
  %v94 = vld [vmem:[%s1 + $0x1d8] sm:$0xff]
  %v95 = vld [vmem:[%s1 + $0x1e0] sm:$0xff]
  %v96 = vld [vmem:[%s1 + $0x1e8] sm:$0xff]
  %v97 = vld [vmem:[%s1 + $0x1f0] sm:$0xff]
  %v98 = vld [vmem:[%s1 + $0x1f8] sm:$0xff]
  %v99 = vld [vmem:[%s1 + $0x200] sm:$0xff]
  %v100 = vld [vmem:[%s1 + $0x208] sm:$0xff]
  %v101 = vld [vmem:[%s1 + $0x210] sm:$0xff]
  %v102 = vld [vmem:[%s1 + $0x218] sm:$0xff]
  %v103 = vld [vmem:[%s1 + $0x220] sm:$0xff]
  %v104 = vld [vmem:[%s1 + $0x228] sm:$0xff]
  %v105 = vld [vmem:[%s1 + $0x230] sm:$0xff]
  %v106 = vld [vmem:[%s1 + $0x238] sm:$0xff]
  %v107 = vld [vmem:[%s1 + $0x240] sm:$0xff]
  %v108 = vld [vmem:[%s1 + $0x248] sm:$0xff]
  %v109 = vld [vmem:[%s1 + $0x250] sm:$0xff]
  %v110 = vld [vmem:[%s1 + $0x258] sm:$0xff]
  %v111 = vld [vmem:[%s1 + $0x260] sm:$0xff]
  %v112 = vld [vmem:[%s1 + $0x268] sm:$0xff]
  %v113 = vld [vmem:[%s1 + $0x270] sm:$0xff]
  %v114 = vld [vmem:[%s1 + $0x278] sm:$0xff]
  %v115 = vld [vmem:[%s1 + $0x280] sm:$0xff]
  %v116 = vld [vmem:[%s1 + $0x288] sm:$0xff]
  %v117 = vld [vmem:[%s1 + $0x290] sm:$0xff]
  %v118 = vld [vmem:[%s1 + $0x298] sm:$0xff]
  %v119 = vld [vmem:[%s1 + $0x2a0] sm:$0xff]
  %v120 = vld [vmem:[%s1 + $0x2a8] sm:$0xff]
  %v121 = vld [vmem:[%s1 + $0x2b0] sm:$0xff]
  %v122 = vld [vmem:[%s1 + $0x2b8] sm:$0xff]
  %v123 = vld [vmem:[%s1 + $0x2c0] sm:$0xff]
  %v124 = vld [vmem:[%s1 + $0x2c8] sm:$0xff]
  %v125 = vld [vmem:[%s1 + $0x2d0] sm:$0xff]
  %v126 = vld [vmem:[%s1 + $0x2d8] sm:$0xff]
  %v127 = vld [vmem:[%s1 + $0x2e0] sm:$0xff]
  %v128 = vld [vmem:[%s1 + $0x2e8] sm:$0xff]
  %v129 = vld [vmem:[%s1 + $0x2f0] sm:$0xff]
  %v130 = vld [vmem:[%s1 + $0x2f8] sm:$0xff]
  %v131 = vld [vmem:[%s1 + $0x300] sm:$0xff]
  %v132 = vld [vmem:[%s1 + $0x308] sm:$0xff]
  %v133 = vld [vmem:[%s1 + $0x310] sm:$0xff]
  %v134 = vld [vmem:[%s1 + $0x318] sm:$0xff]
  %v135 = vld [vmem:[%s1 + $0x320] sm:$0xff]
  %v136 = vld [vmem:[%s1 + $0x328] sm:$0xff]
  %v137 = vld [vmem:[%s1 + $0x330] sm:$0xff]
  %v138 = vld [vmem:[%s1 + $0x338] sm:$0xff]
  %v139 = vld [vmem:[%s1 + $0x340] sm:$0xff]
  %v140 = vld [vmem:[%s1 + $0x348] sm:$0xff]
  %v141 = vld [vmem:[%s1 + $0x350] sm:$0xff]
  %v142 = vld [vmem:[%s1 + $0x358] sm:$0xff]
  %v143 = vld [vmem:[%s1 + $0x360] sm:$0xff]
  %v144 = vld [vmem:[%s1 + $0x368] sm:$0xff]
  %v145 = vld [vmem:[%s1 + $0x370] sm:$0xff]
  %v146 = vld [vmem:[%s1 + $0x378] sm:$0xff]
  %v147 = vld [vmem:[%s1 + $0x380] sm:$0xff]
  %v148 = vld [vmem:[%s1 + $0x388] sm:$0xff]
  %v149 = vld [vmem:[%s1 + $0x390] sm:$0xff]
  %v150 = vld [vmem:[%s1 + $0x398] sm:$0xff]
  %v151 = vld [vmem:[%s1 + $0x3a0] sm:$0xff]
  %v152 = vld [vmem:[%s1 + $0x3a8] sm:$0xff]
  %v153 = vld [vmem:[%s1 + $0x3b0] sm:$0xff]
  %v154 = vld [vmem:[%s1 + $0x3b8] sm:$0xff]
  %v155 = vld [vmem:[%s1 + $0x3c0] sm:$0xff]
  %v156 = vld [vmem:[%s1 + $0x3c8] sm:$0xff]
  %v157 = vld [vmem:[%s1 + $0x3d0] sm:$0xff]
  %v158 = vld [vmem:[%s1 + $0x3d8] sm:$0xff]
  %v159 = vld [vmem:[%s1 + $0x3e0] sm:$0xff]
  %v160 = vld [vmem:[%s1 + $0x3e8] sm:$0xff]
  %v161 = vld [vmem:[%s1 + $0x3f0] sm:$0xff]
  %v162 = vld [vmem:[%s1 + $0x3f8] sm:$0xff]
  %v163 = vld [vmem:[%s1 + $0x400] sm:$0xff]
  %v164 = vld [vmem:[%s1 + $0x408] sm:$0xff]
  %v165 = vld [vmem:[%s1 + $0x410] sm:$0xff]
  %v166 = vld [vmem:[%s1 + $0x418] sm:$0xff]
  %v167 = vld [vmem:[%s1 + $0x420] sm:$0xff]
  %v168 = vld [vmem:[%s1 + $0x428] sm:$0xff]
  %v169 = vld [vmem:[%s1 + $0x430] sm:$0xff]
  %v170 = vld [vmem:[%s1 + $0x438] sm:$0xff]
  %v171 = vld [vmem:[%s1 + $0x440] sm:$0xff]
  %v172 = vld [vmem:[%s1 + $0x448] sm:$0xff]
  %v173 = vld [vmem:[%s1 + $0x450] sm:$0xff]
  %v174 = vld [vmem:[%s1 + $0x458] sm:$0xff]
  %v175 = vld [vmem:[%s1 + $0x460] sm:$0xff]
  %v176 = vld [vmem:[%s1 + $0x468] sm:$0xff]
  %v177 = vld [vmem:[%s1 + $0x470] sm:$0xff]
  %v178 = vld [vmem:[%s1 + $0x478] sm:$0xff]
  %v179 = vld [vmem:[%s1 + $0x480] sm:$0xff]
  %v180 = vld [vmem:[%s1 + $0x488] sm:$0xff]
  %v181 = vld [vmem:[%s1 + $0x490] sm:$0xff]
  %v182 = vld [vmem:[%s1 + $0x498] sm:$0xff]
  %v183 = vld [vmem:[%s1 + $0x4a0] sm:$0xff]
  %v184 = vld [vmem:[%s1 + $0x4a8] sm:$0xff]
  %v185 = vld [vmem:[%s1 + $0x4b0] sm:$0xff]
  %v186 = vld [vmem:[%s1 + $0x4b8] sm:$0xff]
  %v187 = vld [vmem:[%s1 + $0x4c0] sm:$0xff]
  %v188 = vld [vmem:[%s1 + $0x4c8] sm:$0xff]
  %v189 = vld [vmem:[%s1 + $0x4d0] sm:$0xff]
  %v190 = vld [vmem:[%s1 + $0x4d8] sm:$0xff]
  %v191 = vld [vmem:[%s1 + $0x4e0] sm:$0xff]
  %v192 = vld [vmem:[%s1 + $0x4e8] sm:$0xff]
  %v193 = vld [vmem:[%s1 + $0x4f0] sm:$0xff]
  %v194 = vld [vmem:[%s1 + $0x4f8] sm:$0xff]
  %v195 = vld [vmem:[%s1 + $0x500] sm:$0xff]
  %v196 = vld [vmem:[%s1 + $0x508] sm:$0xff]
  %v197 = vld [vmem:[%s1 + $0x510] sm:$0xff]
  %v198 = vld [vmem:[%s1 + $0x518] sm:$0xff]
  %v199 = vld [vmem:[%s1 + $0x520] sm:$0xff]
  %v200 = vld [vmem:[%s1 + $0x528] sm:$0xff]
  %v201 = vld [vmem:[%s1 + $0x530] sm:$0xff]
  %v202 = vld [vmem:[%s1 + $0x538] sm:$0xff]
  %v203 = vld [vmem:[%s1 + $0x540] sm:$0xff]
  %v204 = vld [vmem:[%s1 + $0x548] sm:$0xff]
  %v205 = vld [vmem:[%s1 + $0x550] sm:$0xff]
  %v206 = vld [vmem:[%s1 + $0x558] sm:$0xff]
  %v207 = vld [vmem:[%s1 + $0x560] sm:$0xff]
  %v208 = vld [vmem:[%s1 + $0x568] sm:$0xff]
  %v209 = vld [vmem:[%s1 + $0x570] sm:$0xff]
  %v210 = vld [vmem:[%s1 + $0x578] sm:$0xff]
  %v211 = vld [vmem:[%s1 + $0x580] sm:$0xff]
  %v212 = vld [vmem:[%s1 + $0x588] sm:$0xff]
  %v213 = vld [vmem:[%s1 + $0x590] sm:$0xff]
  %v214 = vld [vmem:[%s1 + $0x598] sm:$0xff]
  %v215 = vld [vmem:[%s1 + $0x5a0] sm:$0xff]
  %v216 = vld [vmem:[%s1 + $0x5a8] sm:$0xff]
  %v217 = vld [vmem:[%s1 + $0x5b0] sm:$0xff]
  %v218 = vld [vmem:[%s1 + $0x5b8] sm:$0xff]
  %v219 = vld [vmem:[%s1 + $0x5c0] sm:$0xff]
  %v220 = vld [vmem:[%s1 + $0x5c8] sm:$0xff]
  %v221 = vld [vmem:[%s1 + $0x5d0] sm:$0xff]
  %v222 = vld [vmem:[%s1 + $0x5d8] sm:$0xff]
  %v223 = vld [vmem:[%s1 + $0x5e0] sm:$0xff]
  %v224 = vld [vmem:[%s1 + $0x5e8] sm:$0xff]
  %v225 = vld [vmem:[%s1 + $0x5f0] sm:$0xff]
  %v226 = vld [vmem:[%s1 + $0x5f8] sm:$0xff]
  %v227 = vld [vmem:[%s1 + $0x600] sm:$0xff]
  %v228 = vld [vmem:[%s1 + $0x608] sm:$0xff]
  %v229 = vld [vmem:[%s1 + $0x610] sm:$0xff]
  %v230 = vld [vmem:[%s1 + $0x618] sm:$0xff]
  %v231 = vld [vmem:[%s6] ss:$8 sm:$0xf]
  %v233 = vperm.slane %v231, 0
  %v234 = vperm.slane %v231, 1
  %v235 = vperm.slane %v231, 2
  %v236 = vperm.slane %v231, 3
  %v249 = vunpack.c.l.b16 %v27
  %v250 = vunpack.c.h.b16 %v27
  %v251 = vunpack.c.l.b16 %v28
  %v252 = vunpack.c.h.b16 %v28
  %v253 = vunpack.c.l.b16 %v29
  %v254 = vunpack.c.h.b16 %v29
  %v255 = vunpack.c.l.b16 %v30
  %v256 = vunpack.c.l.b16 %v31
  %v257 = vunpack.c.h.b16 %v31
  %v258 = vunpack.c.l.b16 %v32
  %v259 = vunpack.c.h.b16 %v32
  %v260 = vunpack.c.l.b16 %v33
  %v261 = vunpack.c.h.b16 %v33
  %v262 = vunpack.c.l.b16 %v34
  %v263 = vpack.c.b16 %v256, %v249
  %v264 = vpack.c.b16 %v257, %v250
  %v265 = vpack.c.b16 %v258, %v251
  %v266 = vpack.c.b16 %v259, %v252
  %v267 = vpack.c.b16 %v260, %v253
  %v268 = vpack.c.b16 %v261, %v254
  %v269 = vpack.c.b16 %v262, %v255
  %v472 = vunpack.c.l.b16 %v35
  %v473 = vunpack.c.h.b16 %v35
  %v474 = vunpack.c.l.b16 %v36
  %v475 = vunpack.c.h.b16 %v36
  %v476 = vunpack.c.l.b16 %v37
  %v477 = vunpack.c.h.b16 %v37
  %v478 = vunpack.c.l.b16 %v38
  %v479 = vunpack.c.h.b16 %v38
  %v480 = vunpack.c.l.b16 %v39
  %v481 = vunpack.c.h.b16 %v39
  %v482 = vunpack.c.l.b16 %v40
  %v483 = vunpack.c.h.b16 %v40
  %v484 = vunpack.c.l.b16 %v41
  %v485 = vunpack.c.h.b16 %v41
  %v486 = vunpack.c.l.b16 %v42
  %v487 = vunpack.c.h.b16 %v42
  %v488 = vunpack.c.l.b16 %v43
  %v489 = vunpack.c.h.b16 %v43
  %v490 = vunpack.c.l.b16 %v44
  %v491 = vunpack.c.h.b16 %v44
  %v492 = vunpack.c.l.b16 %v45
  %v493 = vunpack.c.h.b16 %v45
  %v494 = vunpack.c.l.b16 %v46
  %v495 = vunpack.c.h.b16 %v46
  %v496 = vunpack.c.l.b16 %v47
  %v497 = vunpack.c.h.b16 %v47
  %v498 = vunpack.c.l.b16 %v48
  %v499 = vunpack.c.h.b16 %v48
  %v500 = vunpack.c.l.b16 %v49
  %v501 = vunpack.c.h.b16 %v49
  %v502 = vunpack.c.l.b16 %v50
  %v503 = vunpack.c.h.b16 %v50
  %v504 = vunpack.c.l.b16 %v51
  %v505 = vunpack.c.h.b16 %v51
  %v506 = vunpack.c.l.b16 %v52
  %v507 = vunpack.c.h.b16 %v52
  %v508 = vunpack.c.l.b16 %v53
  %v509 = vunpack.c.h.b16 %v53
  %v510 = vunpack.c.l.b16 %v54
  %v511 = vunpack.c.h.b16 %v54
  %v512 = vunpack.c.l.b16 %v55
  %v513 = vunpack.c.h.b16 %v55
  %v514 = vunpack.c.l.b16 %v56
  %v515 = vunpack.c.h.b16 %v56
  %v516 = vunpack.c.l.b16 %v57
  %v517 = vunpack.c.h.b16 %v57
  %v518 = vunpack.c.l.b16 %v58
  %v519 = vunpack.c.h.b16 %v58
  %v520 = vunpack.c.l.b16 %v59
  %v521 = vunpack.c.h.b16 %v59
  %v522 = vunpack.c.l.b16 %v60
  %v523 = vunpack.c.h.b16 %v60
  %v524 = vunpack.c.l.b16 %v61
  %v525 = vunpack.c.h.b16 %v61
  %v526 = vunpack.c.l.b16 %v62
  %v527 = vunpack.c.h.b16 %v62
  %v528 = vunpack.c.l.b16 %v63
  %v529 = vunpack.c.h.b16 %v63
  %v530 = vunpack.c.l.b16 %v64
  %v531 = vunpack.c.h.b16 %v64
  %v532 = vunpack.c.l.b16 %v65
  %v533 = vunpack.c.h.b16 %v65
  %v534 = vunpack.c.l.b16 %v66
  %v535 = vunpack.c.h.b16 %v66
  %v536 = vunpack.c.l.b16 %v67
  %v537 = vunpack.c.h.b16 %v67
  %v538 = vunpack.c.l.b16 %v68
  %v539 = vunpack.c.h.b16 %v68
  %v540 = vunpack.c.l.b16 %v69
  %v541 = vunpack.c.h.b16 %v69
  %v542 = vunpack.c.l.b16 %v70
  %v543 = vunpack.c.h.b16 %v70
  %v544 = vunpack.c.l.b16 %v71
  %v545 = vunpack.c.h.b16 %v71
  %v546 = vunpack.c.l.b16 %v72
  %v547 = vunpack.c.h.b16 %v72
  %v548 = vunpack.c.l.b16 %v73
  %v549 = vunpack.c.h.b16 %v73
  %v550 = vunpack.c.l.b16 %v74
  %v551 = vunpack.c.h.b16 %v74
  %v552 = vunpack.c.l.b16 %v75
  %v553 = vunpack.c.h.b16 %v75
  %v554 = vunpack.c.l.b16 %v76
  %v555 = vunpack.c.h.b16 %v76
  %v556 = vunpack.c.l.b16 %v77
  %v557 = vunpack.c.h.b16 %v77
  %v558 = vunpack.c.l.b16 %v78
  %v559 = vunpack.c.h.b16 %v78
  %v560 = vunpack.c.l.b16 %v79
  %v561 = vunpack.c.h.b16 %v79
  %v562 = vunpack.c.l.b16 %v80
  %v563 = vunpack.c.h.b16 %v80
  %v564 = vunpack.c.l.b16 %v81
  %v565 = vunpack.c.h.b16 %v81
  %v566 = vunpack.c.l.b16 %v82
  %v567 = vunpack.c.h.b16 %v82
  %v568 = vunpack.c.l.b16 %v83
  %v569 = vunpack.c.h.b16 %v83
  %v570 = vunpack.c.l.b16 %v84
  %v571 = vunpack.c.h.b16 %v84
  %v572 = vunpack.c.l.b16 %v85
  %v573 = vunpack.c.h.b16 %v85
  %v574 = vunpack.c.l.b16 %v86
  %v575 = vunpack.c.h.b16 %v86
  %v576 = vunpack.c.l.b16 %v87
  %v577 = vunpack.c.h.b16 %v87
  %v578 = vunpack.c.l.b16 %v88
  %v579 = vunpack.c.h.b16 %v88
  %v580 = vunpack.c.l.b16 %v89
  %v581 = vunpack.c.h.b16 %v89
  %v582 = vunpack.c.l.b16 %v90
  %v583 = vunpack.c.h.b16 %v90
  %v584 = vunpack.c.l.b16 %v91
  %v585 = vunpack.c.h.b16 %v91
  %v586 = vunpack.c.l.b16 %v92
  %v587 = vunpack.c.h.b16 %v92
  %v588 = vunpack.c.l.b16 %v93
  %v589 = vunpack.c.h.b16 %v93
  %v590 = vunpack.c.l.b16 %v94
  %v591 = vunpack.c.h.b16 %v94
  %v592 = vunpack.c.l.b16 %v95
  %v593 = vunpack.c.h.b16 %v95
  %v594 = vunpack.c.l.b16 %v96
  %v595 = vunpack.c.h.b16 %v96
  %v596 = vunpack.c.l.b16 %v97
  %v597 = vunpack.c.h.b16 %v97
  %v598 = vunpack.c.l.b16 %v98
  %v599 = vunpack.c.h.b16 %v98
  %v600 = vunpack.c.l.b16 %v99
  %v601 = vunpack.c.h.b16 %v99
  %v602 = vunpack.c.l.b16 %v100
  %v603 = vunpack.c.h.b16 %v100
  %v604 = vunpack.c.l.b16 %v101
  %v605 = vunpack.c.h.b16 %v101
  %v606 = vunpack.c.l.b16 %v102
  %v607 = vunpack.c.h.b16 %v102
  %v608 = vunpack.c.l.b16 %v103
  %v609 = vunpack.c.h.b16 %v103
  %v610 = vunpack.c.l.b16 %v104
  %v611 = vunpack.c.h.b16 %v104
  %v612 = vunpack.c.l.b16 %v105
  %v613 = vunpack.c.h.b16 %v105
  %v614 = vunpack.c.l.b16 %v106
  %v615 = vunpack.c.h.b16 %v106
  %v616 = vunpack.c.l.b16 %v107
  %v617 = vunpack.c.h.b16 %v107
  %v618 = vunpack.c.l.b16 %v108
  %v619 = vunpack.c.h.b16 %v108
  %v620 = vunpack.c.l.b16 %v109
  %v621 = vunpack.c.h.b16 %v109
  %v622 = vunpack.c.l.b16 %v110
  %v623 = vunpack.c.h.b16 %v110
  %v624 = vunpack.c.l.b16 %v111
  %v625 = vunpack.c.h.b16 %v111
  %v626 = vunpack.c.l.b16 %v112
  %v627 = vunpack.c.h.b16 %v112
  %v628 = vunpack.c.l.b16 %v113
  %v629 = vunpack.c.h.b16 %v113
  %v630 = vunpack.c.l.b16 %v114
  %v631 = vunpack.c.h.b16 %v114
  %v632 = vunpack.c.l.b16 %v115
  %v633 = vunpack.c.h.b16 %v115
  %v634 = vunpack.c.l.b16 %v116
  %v635 = vunpack.c.h.b16 %v116
  %v636 = vunpack.c.l.b16 %v117
  %v637 = vunpack.c.h.b16 %v117
  %v638 = vunpack.c.l.b16 %v118
  %v639 = vunpack.c.h.b16 %v118
  %v640 = vunpack.c.l.b16 %v119
  %v641 = vunpack.c.h.b16 %v119
  %v642 = vunpack.c.l.b16 %v120
  %v643 = vunpack.c.h.b16 %v120
  %v644 = vunpack.c.l.b16 %v121
  %v645 = vunpack.c.h.b16 %v121
  %v646 = vunpack.c.l.b16 %v122
  %v647 = vunpack.c.h.b16 %v122
  %v648 = vunpack.c.l.b16 %v123
  %v649 = vunpack.c.h.b16 %v123
  %v650 = vunpack.c.l.b16 %v124
  %v651 = vunpack.c.h.b16 %v124
  %v652 = vunpack.c.l.b16 %v125
  %v653 = vunpack.c.h.b16 %v125
  %v654 = vunpack.c.l.b16 %v126
  %v655 = vunpack.c.h.b16 %v126
  %v656 = vunpack.c.l.b16 %v127
  %v657 = vunpack.c.h.b16 %v127
  %v658 = vunpack.c.l.b16 %v128
  %v659 = vunpack.c.h.b16 %v128
  %v660 = vunpack.c.l.b16 %v129
  %v661 = vunpack.c.h.b16 %v129
  %v662 = vunpack.c.l.b16 %v130
  %v663 = vunpack.c.h.b16 %v130
  %v664 = vunpack.c.l.b16 %v131
  %v665 = vunpack.c.h.b16 %v131
  %v666 = vunpack.c.l.b16 %v132
  %v667 = vunpack.c.h.b16 %v132
  %v668 = vunpack.c.l.b16 %v133
  %v669 = vunpack.c.h.b16 %v133
  %v670 = vunpack.c.l.b16 %v134
  %v671 = vunpack.c.h.b16 %v134
  %v672 = vunpack.c.l.b16 %v135
  %v673 = vunpack.c.h.b16 %v135
  %v674 = vunpack.c.l.b16 %v136
  %v675 = vunpack.c.h.b16 %v136
  %v676 = vunpack.c.l.b16 %v137
  %v677 = vunpack.c.h.b16 %v137
  %v678 = vunpack.c.l.b16 %v138
  %v679 = vunpack.c.h.b16 %v138
  %v680 = vunpack.c.l.b16 %v139
  %v681 = vunpack.c.h.b16 %v139
  %v682 = vunpack.c.l.b16 %v140
  %v683 = vunpack.c.h.b16 %v140
  %v684 = vunpack.c.l.b16 %v141
  %v685 = vunpack.c.h.b16 %v141
  %v686 = vunpack.c.l.b16 %v142
  %v687 = vunpack.c.h.b16 %v142
  %v688 = vunpack.c.l.b16 %v143
  %v689 = vunpack.c.h.b16 %v143
  %v690 = vunpack.c.l.b16 %v144
  %v691 = vunpack.c.h.b16 %v144
  %v692 = vunpack.c.l.b16 %v145
  %v693 = vunpack.c.h.b16 %v145
  %v694 = vunpack.c.l.b16 %v146
  %v695 = vunpack.c.h.b16 %v146
  %v696 = vunpack.c.l.b16 %v147
  %v697 = vunpack.c.h.b16 %v147
  %v698 = vunpack.c.l.b16 %v148
  %v699 = vunpack.c.h.b16 %v148
  %v700 = vunpack.c.l.b16 %v149
  %v701 = vunpack.c.h.b16 %v149
  %v702 = vunpack.c.l.b16 %v150
  %v703 = vunpack.c.h.b16 %v150
  %v704 = vunpack.c.l.b16 %v151
  %v705 = vunpack.c.h.b16 %v151
  %v706 = vunpack.c.l.b16 %v152
  %v707 = vunpack.c.h.b16 %v152
  %v708 = vunpack.c.l.b16 %v153
  %v709 = vunpack.c.h.b16 %v153
  %v710 = vunpack.c.l.b16 %v154
  %v711 = vunpack.c.h.b16 %v154
  %v712 = vunpack.c.l.b16 %v155
  %v713 = vunpack.c.h.b16 %v155
  %v714 = vunpack.c.l.b16 %v156
  %v715 = vunpack.c.h.b16 %v156
  %v716 = vunpack.c.l.b16 %v157
  %v717 = vunpack.c.h.b16 %v157
  %v718 = vunpack.c.l.b16 %v158
  %v719 = vunpack.c.h.b16 %v158
  %v720 = vunpack.c.l.b16 %v159
  %v721 = vunpack.c.h.b16 %v159
  %v722 = vunpack.c.l.b16 %v160
  %v723 = vunpack.c.h.b16 %v160
  %v724 = vunpack.c.l.b16 %v161
  %v725 = vunpack.c.h.b16 %v161
  %v726 = vunpack.c.l.b16 %v162
  %v727 = vunpack.c.h.b16 %v162
  %v728 = vunpack.c.l.b16 %v163
  %v729 = vunpack.c.h.b16 %v163
  %v730 = vunpack.c.l.b16 %v164
  %v731 = vunpack.c.h.b16 %v164
  %v732 = vunpack.c.l.b16 %v165
  %v733 = vunpack.c.h.b16 %v165
  %v734 = vunpack.c.l.b16 %v166
  %v735 = vunpack.c.h.b16 %v166
  %v736 = vunpack.c.l.b16 %v167
  %v737 = vunpack.c.h.b16 %v167
  %v738 = vunpack.c.l.b16 %v168
  %v739 = vunpack.c.h.b16 %v168
  %v740 = vunpack.c.l.b16 %v169
  %v741 = vunpack.c.h.b16 %v169
  %v742 = vunpack.c.l.b16 %v170
  %v743 = vunpack.c.h.b16 %v170
  %v744 = vunpack.c.l.b16 %v171
  %v745 = vunpack.c.h.b16 %v171
  %v746 = vunpack.c.l.b16 %v172
  %v747 = vunpack.c.h.b16 %v172
  %v748 = vunpack.c.l.b16 %v173
  %v749 = vunpack.c.h.b16 %v173
  %v750 = vunpack.c.l.b16 %v174
  %v751 = vunpack.c.h.b16 %v174
  %v752 = vunpack.c.l.b16 %v175
  %v753 = vunpack.c.h.b16 %v175
  %v754 = vunpack.c.l.b16 %v176
  %v755 = vunpack.c.h.b16 %v176
  %v756 = vunpack.c.l.b16 %v177
  %v757 = vunpack.c.h.b16 %v177
  %v758 = vunpack.c.l.b16 %v178
  %v759 = vunpack.c.h.b16 %v178
  %v760 = vunpack.c.l.b16 %v179
  %v761 = vunpack.c.h.b16 %v179
  %v762 = vunpack.c.l.b16 %v180
  %v763 = vunpack.c.h.b16 %v180
  %v764 = vunpack.c.l.b16 %v181
  %v765 = vunpack.c.h.b16 %v181
  %v766 = vunpack.c.l.b16 %v182
  %v767 = vunpack.c.h.b16 %v182
  %v768 = vunpack.c.l.b16 %v183
  %v769 = vunpack.c.h.b16 %v183
  %v770 = vunpack.c.l.b16 %v184
  %v771 = vunpack.c.h.b16 %v184
  %v772 = vunpack.c.l.b16 %v185
  %v773 = vunpack.c.h.b16 %v185
  %v774 = vunpack.c.l.b16 %v186
  %v775 = vunpack.c.h.b16 %v186
  %v776 = vunpack.c.l.b16 %v187
  %v777 = vunpack.c.h.b16 %v187
  %v778 = vunpack.c.l.b16 %v188
  %v779 = vunpack.c.h.b16 %v188
  %v780 = vunpack.c.l.b16 %v189
  %v781 = vunpack.c.h.b16 %v189
  %v782 = vunpack.c.l.b16 %v190
  %v783 = vunpack.c.h.b16 %v190
  %v784 = vunpack.c.l.b16 %v191
  %v785 = vunpack.c.h.b16 %v191
  %v786 = vunpack.c.l.b16 %v192
  %v787 = vunpack.c.h.b16 %v192
  %v788 = vunpack.c.l.b16 %v193
  %v789 = vunpack.c.h.b16 %v193
  %v790 = vunpack.c.l.b16 %v194
  %v791 = vunpack.c.h.b16 %v194
  %v792 = vunpack.c.l.b16 %v195
  %v793 = vunpack.c.h.b16 %v195
  %v794 = vunpack.c.l.b16 %v196
  %v795 = vunpack.c.h.b16 %v196
  %v796 = vunpack.c.l.b16 %v197
  %v797 = vunpack.c.h.b16 %v197
  %v798 = vunpack.c.l.b16 %v198
  %v799 = vunpack.c.h.b16 %v198
  %v800 = vunpack.c.l.b16 %v199
  %v801 = vunpack.c.h.b16 %v199
  %v802 = vunpack.c.l.b16 %v200
  %v803 = vunpack.c.h.b16 %v200
  %v804 = vunpack.c.l.b16 %v201
  %v805 = vunpack.c.h.b16 %v201
  %v806 = vunpack.c.l.b16 %v202
  %v807 = vunpack.c.h.b16 %v202
  %v808 = vunpack.c.l.b16 %v203
  %v809 = vunpack.c.h.b16 %v203
  %v810 = vunpack.c.l.b16 %v204
  %v811 = vunpack.c.h.b16 %v204
  %v812 = vunpack.c.l.b16 %v205
  %v813 = vunpack.c.h.b16 %v205
  %v814 = vunpack.c.l.b16 %v206
  %v815 = vunpack.c.h.b16 %v206
  %v816 = vunpack.c.l.b16 %v207
  %v817 = vunpack.c.h.b16 %v207
  %v818 = vunpack.c.l.b16 %v208
  %v819 = vunpack.c.h.b16 %v208
  %v820 = vunpack.c.l.b16 %v209
  %v821 = vunpack.c.h.b16 %v209
  %v822 = vunpack.c.l.b16 %v210
  %v823 = vunpack.c.h.b16 %v210
  %v824 = vunpack.c.l.b16 %v211
  %v825 = vunpack.c.h.b16 %v211
  %v826 = vunpack.c.l.b16 %v212
  %v827 = vunpack.c.h.b16 %v212
  %v828 = vunpack.c.l.b16 %v213
  %v829 = vunpack.c.h.b16 %v213
  %v830 = vunpack.c.l.b16 %v214
  %v831 = vunpack.c.h.b16 %v214
  %v832 = vunpack.c.l.b16 %v215
  %v833 = vunpack.c.h.b16 %v215
  %v834 = vunpack.c.l.b16 %v216
  %v835 = vunpack.c.h.b16 %v216
  %v836 = vunpack.c.l.b16 %v217
  %v837 = vunpack.c.h.b16 %v217
  %v838 = vunpack.c.l.b16 %v218
  %v839 = vunpack.c.h.b16 %v218
  %v840 = vunpack.c.l.b16 %v219
  %v841 = vunpack.c.h.b16 %v219
  %v842 = vunpack.c.l.b16 %v220
  %v843 = vunpack.c.h.b16 %v220
  %v844 = vunpack.c.l.b16 %v221
  %v845 = vunpack.c.h.b16 %v221
  %v846 = vunpack.c.l.b16 %v222
  %v847 = vunpack.c.h.b16 %v222
  %v848 = vunpack.c.l.b16 %v223
  %v849 = vunpack.c.h.b16 %v223
  %v850 = vunpack.c.l.b16 %v224
  %v851 = vunpack.c.h.b16 %v224
  %v852 = vunpack.c.l.b16 %v225
  %v853 = vunpack.c.h.b16 %v225
  %v854 = vunpack.c.l.b16 %v226
  %v855 = vunpack.c.h.b16 %v226
  %v856 = vunpack.c.l.b16 %v227
  %v857 = vunpack.c.h.b16 %v227
  %v858 = vunpack.c.l.b16 %v228
  %v859 = vunpack.c.h.b16 %v228
  %v860 = vunpack.c.l.b16 %v229
  %v861 = vunpack.c.h.b16 %v229
  %v862 = vunpack.c.l.b16 %v230
  %v863 = vunpack.c.h.b16 %v230
  %v864 = vpack.c.b16 %v476, %v472
  %v865 = vpack.c.b16 %v477, %v473
  %v866 = vpack.c.b16 %v478, %v474
  %v867 = vpack.c.b16 %v479, %v475
  %v868 = vpack.c.b16 %v484, %v480
  %v869 = vpack.c.b16 %v485, %v481
  %v870 = vpack.c.b16 %v486, %v482
  %v871 = vpack.c.b16 %v487, %v483
  %v872 = vpack.c.b16 %v492, %v488
  %v873 = vpack.c.b16 %v493, %v489
  %v874 = vpack.c.b16 %v494, %v490
  %v875 = vpack.c.b16 %v495, %v491
  %v876 = vpack.c.b16 %v500, %v496
  %v877 = vpack.c.b16 %v501, %v497
  %v878 = vpack.c.b16 %v502, %v498
  %v879 = vpack.c.b16 %v503, %v499
  %v880 = vpack.c.b16 %v508, %v504
  %v881 = vpack.c.b16 %v509, %v505
  %v882 = vpack.c.b16 %v510, %v506
  %v883 = vpack.c.b16 %v511, %v507
  %v884 = vpack.c.b16 %v516, %v512
  %v885 = vpack.c.b16 %v517, %v513
  %v886 = vpack.c.b16 %v518, %v514
  %v887 = vpack.c.b16 %v519, %v515
  %v888 = vpack.c.b16 %v524, %v520
  %v889 = vpack.c.b16 %v525, %v521
  %v890 = vpack.c.b16 %v526, %v522
  %v891 = vpack.c.b16 %v527, %v523
  %v892 = vpack.c.b16 %v532, %v528
  %v893 = vpack.c.b16 %v533, %v529
  %v894 = vpack.c.b16 %v534, %v530
  %v895 = vpack.c.b16 %v535, %v531
  %v896 = vpack.c.b16 %v540, %v536
  %v897 = vpack.c.b16 %v541, %v537
  %v898 = vpack.c.b16 %v542, %v538
  %v899 = vpack.c.b16 %v543, %v539
  %v900 = vpack.c.b16 %v548, %v544
  %v901 = vpack.c.b16 %v549, %v545
  %v902 = vpack.c.b16 %v550, %v546
  %v903 = vpack.c.b16 %v551, %v547
  %v904 = vpack.c.b16 %v556, %v552
  %v905 = vpack.c.b16 %v557, %v553
  %v906 = vpack.c.b16 %v558, %v554
  %v907 = vpack.c.b16 %v559, %v555
  %v908 = vpack.c.b16 %v564, %v560
  %v909 = vpack.c.b16 %v565, %v561
  %v910 = vpack.c.b16 %v566, %v562
  %v911 = vpack.c.b16 %v567, %v563
  %v912 = vpack.c.b16 %v572, %v568
  %v913 = vpack.c.b16 %v573, %v569
  %v914 = vpack.c.b16 %v574, %v570
  %v915 = vpack.c.b16 %v575, %v571
  %v916 = vpack.c.b16 %v580, %v576
  %v917 = vpack.c.b16 %v581, %v577
  %v918 = vpack.c.b16 %v582, %v578
  %v919 = vpack.c.b16 %v583, %v579
  %v920 = vpack.c.b16 %v588, %v584
  %v921 = vpack.c.b16 %v589, %v585
  %v922 = vpack.c.b16 %v590, %v586
  %v923 = vpack.c.b16 %v591, %v587
  %v924 = vpack.c.b16 %v596, %v592
  %v925 = vpack.c.b16 %v597, %v593
  %v926 = vpack.c.b16 %v598, %v594
  %v927 = vpack.c.b16 %v599, %v595
  %v928 = vpack.c.b16 %v604, %v600
  %v929 = vpack.c.b16 %v605, %v601
  %v930 = vpack.c.b16 %v606, %v602
  %v931 = vpack.c.b16 %v607, %v603
  %v932 = vpack.c.b16 %v612, %v608
  %v933 = vpack.c.b16 %v613, %v609
  %v934 = vpack.c.b16 %v614, %v610
  %v935 = vpack.c.b16 %v615, %v611
  %v936 = vpack.c.b16 %v620, %v616
  %v937 = vpack.c.b16 %v621, %v617
  %v938 = vpack.c.b16 %v622, %v618
  %v939 = vpack.c.b16 %v623, %v619
  %v940 = vpack.c.b16 %v628, %v624
  %v941 = vpack.c.b16 %v629, %v625
  %v942 = vpack.c.b16 %v630, %v626
  %v943 = vpack.c.b16 %v631, %v627
  %v944 = vpack.c.b16 %v636, %v632
  %v945 = vpack.c.b16 %v637, %v633
  %v946 = vpack.c.b16 %v638, %v634
  %v947 = vpack.c.b16 %v639, %v635
  %v948 = vpack.c.b16 %v644, %v640
  %v949 = vpack.c.b16 %v645, %v641
  %v950 = vpack.c.b16 %v646, %v642
  %v951 = vpack.c.b16 %v647, %v643
  %v952 = vpack.c.b16 %v652, %v648
  %v953 = vpack.c.b16 %v653, %v649
  %v954 = vpack.c.b16 %v654, %v650
  %v955 = vpack.c.b16 %v655, %v651
  %v956 = vpack.c.b16 %v660, %v656
  %v957 = vpack.c.b16 %v661, %v657
  %v958 = vpack.c.b16 %v662, %v658
  %v959 = vpack.c.b16 %v663, %v659
  %v960 = vpack.c.b16 %v668, %v664
  %v961 = vpack.c.b16 %v669, %v665
  %v962 = vpack.c.b16 %v670, %v666
  %v963 = vpack.c.b16 %v671, %v667
  %v964 = vpack.c.b16 %v676, %v672
  %v965 = vpack.c.b16 %v677, %v673
  %v966 = vpack.c.b16 %v678, %v674
  %v967 = vpack.c.b16 %v679, %v675
  %v968 = vpack.c.b16 %v684, %v680
  %v969 = vpack.c.b16 %v685, %v681
  %v970 = vpack.c.b16 %v686, %v682
  %v971 = vpack.c.b16 %v687, %v683
  %v972 = vpack.c.b16 %v692, %v688
  %v973 = vpack.c.b16 %v693, %v689
  %v974 = vpack.c.b16 %v694, %v690
  %v975 = vpack.c.b16 %v695, %v691
  %v976 = vpack.c.b16 %v700, %v696
  %v977 = vpack.c.b16 %v701, %v697
  %v978 = vpack.c.b16 %v702, %v698
  %v979 = vpack.c.b16 %v703, %v699
  %v980 = vpack.c.b16 %v708, %v704
  %v981 = vpack.c.b16 %v709, %v705
  %v982 = vpack.c.b16 %v710, %v706
  %v983 = vpack.c.b16 %v711, %v707
  %v984 = vpack.c.b16 %v716, %v712
  %v985 = vpack.c.b16 %v717, %v713
  %v986 = vpack.c.b16 %v718, %v714
  %v987 = vpack.c.b16 %v719, %v715
  %v988 = vpack.c.b16 %v724, %v720
  %v989 = vpack.c.b16 %v725, %v721
  %v990 = vpack.c.b16 %v726, %v722
  %v991 = vpack.c.b16 %v727, %v723
  %v992 = vpack.c.b16 %v732, %v728
  %v993 = vpack.c.b16 %v733, %v729
  %v994 = vpack.c.b16 %v734, %v730
  %v995 = vpack.c.b16 %v735, %v731
  %v996 = vpack.c.b16 %v740, %v736
  %v997 = vpack.c.b16 %v741, %v737
  %v998 = vpack.c.b16 %v742, %v738
  %v999 = vpack.c.b16 %v743, %v739
  %v1000 = vpack.c.b16 %v748, %v744
  %v1001 = vpack.c.b16 %v749, %v745
  %v1002 = vpack.c.b16 %v750, %v746
  %v1003 = vpack.c.b16 %v751, %v747
  %v1004 = vpack.c.b16 %v756, %v752
  %v1005 = vpack.c.b16 %v757, %v753
  %v1006 = vpack.c.b16 %v758, %v754
  %v1007 = vpack.c.b16 %v759, %v755
  %v1008 = vpack.c.b16 %v764, %v760
  %v1009 = vpack.c.b16 %v765, %v761
  %v1010 = vpack.c.b16 %v766, %v762
  %v1011 = vpack.c.b16 %v767, %v763
  %v1012 = vpack.c.b16 %v772, %v768
  %v1013 = vpack.c.b16 %v773, %v769
  %v1014 = vpack.c.b16 %v774, %v770
  %v1015 = vpack.c.b16 %v775, %v771
  %v1016 = vpack.c.b16 %v780, %v776
  %v1017 = vpack.c.b16 %v781, %v777
  %v1018 = vpack.c.b16 %v782, %v778
  %v1019 = vpack.c.b16 %v783, %v779
  %v1020 = vpack.c.b16 %v788, %v784
  %v1021 = vpack.c.b16 %v789, %v785
  %v1022 = vpack.c.b16 %v790, %v786
  %v1023 = vpack.c.b16 %v791, %v787
  %v1024 = vpack.c.b16 %v796, %v792
  %v1025 = vpack.c.b16 %v797, %v793
  %v1026 = vpack.c.b16 %v798, %v794
  %v1027 = vpack.c.b16 %v799, %v795
  %v1028 = vpack.c.b16 %v804, %v800
  %v1029 = vpack.c.b16 %v805, %v801
  %v1030 = vpack.c.b16 %v806, %v802
  %v1031 = vpack.c.b16 %v807, %v803
  %v1032 = vpack.c.b16 %v812, %v808
  %v1033 = vpack.c.b16 %v813, %v809
  %v1034 = vpack.c.b16 %v814, %v810
  %v1035 = vpack.c.b16 %v815, %v811
  %v1036 = vpack.c.b16 %v820, %v816
  %v1037 = vpack.c.b16 %v821, %v817
  %v1038 = vpack.c.b16 %v822, %v818
  %v1039 = vpack.c.b16 %v823, %v819
  %v1040 = vpack.c.b16 %v828, %v824
  %v1041 = vpack.c.b16 %v829, %v825
  %v1042 = vpack.c.b16 %v830, %v826
  %v1043 = vpack.c.b16 %v831, %v827
  %v1044 = vpack.c.b16 %v836, %v832
  %v1045 = vpack.c.b16 %v837, %v833
  %v1046 = vpack.c.b16 %v838, %v834
  %v1047 = vpack.c.b16 %v839, %v835
  %v1048 = vpack.c.b16 %v844, %v840
  %v1049 = vpack.c.b16 %v845, %v841
  %v1050 = vpack.c.b16 %v846, %v842
  %v1051 = vpack.c.b16 %v847, %v843
  %v1052 = vpack.c.b16 %v852, %v848
  %v1053 = vpack.c.b16 %v853, %v849
  %v1054 = vpack.c.b16 %v854, %v850
  %v1055 = vpack.c.b16 %v855, %v851
  %v1056 = vpack.c.b16 %v860, %v856
  %v1057 = vpack.c.b16 %v861, %v857
  %v1058 = vpack.c.b16 %v862, %v858
  %v1059 = vpack.c.b16 %v863, %v859
  %vm1256 = vcmask 130048
  %v1258 = vsel %vm1256, %v269, 0
  %1260 = vmatpush.bf16.msra.mxu0 %v892
  %1261 = vmatpush.bf16.msra.mxu0 %v888
  %1262 = vmatpush.bf16.msra.mxu0 %v884
  %1263 = vmatpush.bf16.msra.mxu0 %v880
  %1264 = vmatpush.bf16.msra.mxu0 %v876
  %1265 = vmatpush.bf16.msra.mxu0 %v872
  %1266 = vmatpush.bf16.msra.mxu0 %v868
  %1267 = vmatpush.bf16.msra.mxu0 %v864
  %1268 = vmatmul.bf16.gmra.mxu0 %v263
  %v1269 = vpop.f32.mrf.mxu0
  %v1270 = vadd.f32 %v233, %v1269
  %v1271 = vpop.f32.mrf.mxu0
  %v1272 = vadd.f32 %v233, %v1271
  %1273 = vdwg.mxu0
  %1274 = vmatpush.bf16.msra.mxu0 %v924
  %1275 = vmatpush.bf16.msra.mxu0 %v920
  %1276 = vmatpush.bf16.msra.mxu0 %v916
  %1277 = vmatpush.bf16.msra.mxu0 %v912
  %1278 = vmatpush.bf16.msra.mxu0 %v908
  %1279 = vmatpush.bf16.msra.mxu0 %v904
  %1280 = vmatpush.bf16.msra.mxu0 %v900
  %1281 = vmatpush.bf16.msra.mxu0 %v896
  %1282 = vmatmul.bf16.gmra.mxu0 %v264
  %v1283 = vpop.f32.mrf.mxu0
  %v1284 = vadd.f32 %v1270, %v1283
  %v1285 = vpop.f32.mrf.mxu0
  %v1286 = vadd.f32 %v1272, %v1285
  %1287 = vdwg.mxu0
  %1288 = vmatpush.bf16.msra.mxu0 %v956
  %1289 = vmatpush.bf16.msra.mxu0 %v952
  %1290 = vmatpush.bf16.msra.mxu0 %v948
  %1291 = vmatpush.bf16.msra.mxu0 %v944
  %1292 = vmatpush.bf16.msra.mxu0 %v940
  %1293 = vmatpush.bf16.msra.mxu0 %v936
  %1294 = vmatpush.bf16.msra.mxu0 %v932
  %1295 = vmatpush.bf16.msra.mxu0 %v928
  %1296 = vmatmul.bf16.gmra.mxu0 %v265
  %v1297 = vpop.f32.mrf.mxu0
  %v1298 = vadd.f32 %v1284, %v1297
  %v1299 = vpop.f32.mrf.mxu0
  %v1300 = vadd.f32 %v1286, %v1299
  %1301 = vdwg.mxu0
  %1302 = vmatpush.bf16.msra.mxu0 %v988
  %1303 = vmatpush.bf16.msra.mxu0 %v984
  %1304 = vmatpush.bf16.msra.mxu0 %v980
  %1305 = vmatpush.bf16.msra.mxu0 %v976
  %1306 = vmatpush.bf16.msra.mxu0 %v972
  %1307 = vmatpush.bf16.msra.mxu0 %v968
  %1308 = vmatpush.bf16.msra.mxu0 %v964
  %1309 = vmatpush.bf16.msra.mxu0 %v960
  %1310 = vmatmul.bf16.gmra.mxu0 %v266
  %v1311 = vpop.f32.mrf.mxu0
  %v1312 = vadd.f32 %v1298, %v1311
  %v1313 = vpop.f32.mrf.mxu0
  %v1314 = vadd.f32 %v1300, %v1313
  %1315 = vdwg.mxu0
  %1316 = vmatpush.bf16.msra.mxu0 %v1020
  %1317 = vmatpush.bf16.msra.mxu0 %v1016
  %1318 = vmatpush.bf16.msra.mxu0 %v1012
  %1319 = vmatpush.bf16.msra.mxu0 %v1008
  %1320 = vmatpush.bf16.msra.mxu0 %v1004
  %1321 = vmatpush.bf16.msra.mxu0 %v1000
  %1322 = vmatpush.bf16.msra.mxu0 %v996
  %1323 = vmatpush.bf16.msra.mxu0 %v992
  %1324 = vmatmul.bf16.gmra.mxu0 %v267
  %v1325 = vpop.f32.mrf.mxu0
  %v1326 = vadd.f32 %v1312, %v1325
  %v1327 = vpop.f32.mrf.mxu0
  %v1328 = vadd.f32 %v1314, %v1327
  %1329 = vdwg.mxu0
  %1330 = vmatpush.bf16.msra.mxu0 %v1052
  %1331 = vmatpush.bf16.msra.mxu0 %v1048
  %1332 = vmatpush.bf16.msra.mxu0 %v1044
  %1333 = vmatpush.bf16.msra.mxu0 %v1040
  %1334 = vmatpush.bf16.msra.mxu0 %v1036
  %1335 = vmatpush.bf16.msra.mxu0 %v1032
  %1336 = vmatpush.bf16.msra.mxu0 %v1028
  %1337 = vmatpush.bf16.msra.mxu0 %v1024
  %1338 = vmatmul.bf16.gmra.mxu0 %v268
  %v1339 = vpop.f32.mrf.mxu0
  %v1340 = vadd.f32 %v1326, %v1339
  %v1341 = vpop.f32.mrf.mxu0
  %v1342 = vadd.f32 %v1328, %v1341
  %1343 = vdwg.mxu0
  %1344 = vmatpush.bf16.msra.mxu0 0
  %1345 = vmatpush.bf16.msra.mxu0 0
  %1346 = vmatpush.bf16.msra.mxu0 0
  %1347 = vmatpush.bf16.msra.mxu0 0
  %1348 = vmatpush.bf16.msra.mxu0 0
  %1349 = vmatpush.bf16.msra.mxu0 0
  %1350 = vmatpush.bf16.msra.mxu0 0
  %1351 = vmatpush.bf16.msra.mxu0 %v1056
  %1352 = vmatmul.bf16.gmra.mxu0 %v1258
  %v1353 = vpop.f32.mrf.mxu0
  %v1354 = vadd.f32 %v1340, %v1353
  %v1355 = vpop.f32.mrf.mxu0
  %v1356 = vadd.f32 %v1342, %v1355
  %1357 = vdwg.mxu0
  %1358 = vmatpush.bf16.msra.mxu0 %v893
  %1359 = vmatpush.bf16.msra.mxu0 %v889
  %1360 = vmatpush.bf16.msra.mxu0 %v885
  %1361 = vmatpush.bf16.msra.mxu0 %v881
  %1362 = vmatpush.bf16.msra.mxu0 %v877
  %1363 = vmatpush.bf16.msra.mxu0 %v873
  %1364 = vmatpush.bf16.msra.mxu0 %v869
  %1365 = vmatpush.bf16.msra.mxu0 %v865
  %1366 = vmatmul.bf16.gmra.mxu0 %v263
  %v1367 = vpop.f32.mrf.mxu0
  %v1368 = vadd.f32 %v234, %v1367
  %v1369 = vpop.f32.mrf.mxu0
  %v1370 = vadd.f32 %v234, %v1369
  %1371 = vdwg.mxu0
  %1372 = vmatpush.bf16.msra.mxu0 %v925
  %1373 = vmatpush.bf16.msra.mxu0 %v921
  %1374 = vmatpush.bf16.msra.mxu0 %v917
  %1375 = vmatpush.bf16.msra.mxu0 %v913
  %1376 = vmatpush.bf16.msra.mxu0 %v909
  %1377 = vmatpush.bf16.msra.mxu0 %v905
  %1378 = vmatpush.bf16.msra.mxu0 %v901
  %1379 = vmatpush.bf16.msra.mxu0 %v897
  %1380 = vmatmul.bf16.gmra.mxu0 %v264
  %v1381 = vpop.f32.mrf.mxu0
  %v1382 = vadd.f32 %v1368, %v1381
  %v1383 = vpop.f32.mrf.mxu0
  %v1384 = vadd.f32 %v1370, %v1383
  %1385 = vdwg.mxu0
  %1386 = vmatpush.bf16.msra.mxu0 %v957
  %1387 = vmatpush.bf16.msra.mxu0 %v953
  %1388 = vmatpush.bf16.msra.mxu0 %v949
  %1389 = vmatpush.bf16.msra.mxu0 %v945
  %1390 = vmatpush.bf16.msra.mxu0 %v941
  %1391 = vmatpush.bf16.msra.mxu0 %v937
  %1392 = vmatpush.bf16.msra.mxu0 %v933
  %1393 = vmatpush.bf16.msra.mxu0 %v929
  %1394 = vmatmul.bf16.gmra.mxu0 %v265
  %v1395 = vpop.f32.mrf.mxu0
  %v1396 = vadd.f32 %v1382, %v1395
  %v1397 = vpop.f32.mrf.mxu0
  %v1398 = vadd.f32 %v1384, %v1397
  %1399 = vdwg.mxu0
  %1400 = vmatpush.bf16.msra.mxu0 %v989
  %1401 = vmatpush.bf16.msra.mxu0 %v985
  %1402 = vmatpush.bf16.msra.mxu0 %v981
  %1403 = vmatpush.bf16.msra.mxu0 %v977
  %1404 = vmatpush.bf16.msra.mxu0 %v973
  %1405 = vmatpush.bf16.msra.mxu0 %v969
  %1406 = vmatpush.bf16.msra.mxu0 %v965
  %1407 = vmatpush.bf16.msra.mxu0 %v961
  %1408 = vmatmul.bf16.gmra.mxu0 %v266
  %v1409 = vpop.f32.mrf.mxu0
  %v1410 = vadd.f32 %v1396, %v1409
  %v1411 = vpop.f32.mrf.mxu0
  %v1412 = vadd.f32 %v1398, %v1411
  %1413 = vdwg.mxu0
  %1414 = vmatpush.bf16.msra.mxu0 %v1021
  %1415 = vmatpush.bf16.msra.mxu0 %v1017
  %1416 = vmatpush.bf16.msra.mxu0 %v1013
  %1417 = vmatpush.bf16.msra.mxu0 %v1009
  %1418 = vmatpush.bf16.msra.mxu0 %v1005
  %1419 = vmatpush.bf16.msra.mxu0 %v1001
  %1420 = vmatpush.bf16.msra.mxu0 %v997
  %1421 = vmatpush.bf16.msra.mxu0 %v993
  %1422 = vmatmul.bf16.gmra.mxu0 %v267
  %v1423 = vpop.f32.mrf.mxu0
  %v1424 = vadd.f32 %v1410, %v1423
  %v1425 = vpop.f32.mrf.mxu0
  %v1426 = vadd.f32 %v1412, %v1425
  %1427 = vdwg.mxu0
  %1428 = vmatpush.bf16.msra.mxu0 %v1053
  %1429 = vmatpush.bf16.msra.mxu0 %v1049
  %1430 = vmatpush.bf16.msra.mxu0 %v1045
  %1431 = vmatpush.bf16.msra.mxu0 %v1041
  %1432 = vmatpush.bf16.msra.mxu0 %v1037
  %1433 = vmatpush.bf16.msra.mxu0 %v1033
  %1434 = vmatpush.bf16.msra.mxu0 %v1029
  %1435 = vmatpush.bf16.msra.mxu0 %v1025
  %1436 = vmatmul.bf16.gmra.mxu0 %v268
  %v1437 = vpop.f32.mrf.mxu0
  %v1438 = vadd.f32 %v1424, %v1437
  %v1439 = vpop.f32.mrf.mxu0
  %v1440 = vadd.f32 %v1426, %v1439
  %1441 = vdwg.mxu0
  %1442 = vmatpush.bf16.msra.mxu0 0
  %1443 = vmatpush.bf16.msra.mxu0 0
  %1444 = vmatpush.bf16.msra.mxu0 0
  %1445 = vmatpush.bf16.msra.mxu0 0
  %1446 = vmatpush.bf16.msra.mxu0 0
  %1447 = vmatpush.bf16.msra.mxu0 0
  %1448 = vmatpush.bf16.msra.mxu0 0
  %1449 = vmatpush.bf16.msra.mxu0 %v1057
  %1450 = vmatmul.bf16.gmra.mxu0 %v1258
  %v1451 = vpop.f32.mrf.mxu0
  %v1452 = vadd.f32 %v1438, %v1451
  %v1453 = vpop.f32.mrf.mxu0
  %v1454 = vadd.f32 %v1440, %v1453
  %1455 = vdwg.mxu0
  %1456 = vmatpush.bf16.msra.mxu0 %v894
  %1457 = vmatpush.bf16.msra.mxu0 %v890
  %1458 = vmatpush.bf16.msra.mxu0 %v886
  %1459 = vmatpush.bf16.msra.mxu0 %v882
  %1460 = vmatpush.bf16.msra.mxu0 %v878
  %1461 = vmatpush.bf16.msra.mxu0 %v874
  %1462 = vmatpush.bf16.msra.mxu0 %v870
  %1463 = vmatpush.bf16.msra.mxu0 %v866
  %1464 = vmatmul.bf16.gmra.mxu0 %v263
  %v1465 = vpop.f32.mrf.mxu0
  %v1466 = vadd.f32 %v235, %v1465
  %v1467 = vpop.f32.mrf.mxu0
  %v1468 = vadd.f32 %v235, %v1467
  %1469 = vdwg.mxu0
  %1470 = vmatpush.bf16.msra.mxu0 %v926
  %1471 = vmatpush.bf16.msra.mxu0 %v922
  %1472 = vmatpush.bf16.msra.mxu0 %v918
  %1473 = vmatpush.bf16.msra.mxu0 %v914
  %1474 = vmatpush.bf16.msra.mxu0 %v910
  %1475 = vmatpush.bf16.msra.mxu0 %v906
  %1476 = vmatpush.bf16.msra.mxu0 %v902
  %1477 = vmatpush.bf16.msra.mxu0 %v898
  %1478 = vmatmul.bf16.gmra.mxu0 %v264
  %v1479 = vpop.f32.mrf.mxu0
  %v1480 = vadd.f32 %v1466, %v1479
  %v1481 = vpop.f32.mrf.mxu0
  %v1482 = vadd.f32 %v1468, %v1481
  %1483 = vdwg.mxu0
  %1484 = vmatpush.bf16.msra.mxu0 %v958
  %1485 = vmatpush.bf16.msra.mxu0 %v954
  %1486 = vmatpush.bf16.msra.mxu0 %v950
  %1487 = vmatpush.bf16.msra.mxu0 %v946
  %1488 = vmatpush.bf16.msra.mxu0 %v942
  %1489 = vmatpush.bf16.msra.mxu0 %v938
  %1490 = vmatpush.bf16.msra.mxu0 %v934
  %1491 = vmatpush.bf16.msra.mxu0 %v930
  %1492 = vmatmul.bf16.gmra.mxu0 %v265
  %v1493 = vpop.f32.mrf.mxu0
  %v1494 = vadd.f32 %v1480, %v1493
  %v1495 = vpop.f32.mrf.mxu0
  %v1496 = vadd.f32 %v1482, %v1495
  %1497 = vdwg.mxu0
  %1498 = vmatpush.bf16.msra.mxu0 %v990
  %1499 = vmatpush.bf16.msra.mxu0 %v986
  %1500 = vmatpush.bf16.msra.mxu0 %v982
  %1501 = vmatpush.bf16.msra.mxu0 %v978
  %1502 = vmatpush.bf16.msra.mxu0 %v974
  %1503 = vmatpush.bf16.msra.mxu0 %v970
  %1504 = vmatpush.bf16.msra.mxu0 %v966
  %1505 = vmatpush.bf16.msra.mxu0 %v962
  %1506 = vmatmul.bf16.gmra.mxu0 %v266
  %v1507 = vpop.f32.mrf.mxu0
  %v1508 = vadd.f32 %v1494, %v1507
  %v1509 = vpop.f32.mrf.mxu0
  %v1510 = vadd.f32 %v1496, %v1509
  %1511 = vdwg.mxu0
  %1512 = vmatpush.bf16.msra.mxu0 %v1022
  %1513 = vmatpush.bf16.msra.mxu0 %v1018
  %1514 = vmatpush.bf16.msra.mxu0 %v1014
  %1515 = vmatpush.bf16.msra.mxu0 %v1010
  %1516 = vmatpush.bf16.msra.mxu0 %v1006
  %1517 = vmatpush.bf16.msra.mxu0 %v1002
  %1518 = vmatpush.bf16.msra.mxu0 %v998
  %1519 = vmatpush.bf16.msra.mxu0 %v994
  %1520 = vmatmul.bf16.gmra.mxu0 %v267
  %v1521 = vpop.f32.mrf.mxu0
  %v1522 = vadd.f32 %v1508, %v1521
  %v1523 = vpop.f32.mrf.mxu0
  %v1524 = vadd.f32 %v1510, %v1523
  %1525 = vdwg.mxu0
  %1526 = vmatpush.bf16.msra.mxu0 %v1054
  %1527 = vmatpush.bf16.msra.mxu0 %v1050
  %1528 = vmatpush.bf16.msra.mxu0 %v1046
  %1529 = vmatpush.bf16.msra.mxu0 %v1042
  %1530 = vmatpush.bf16.msra.mxu0 %v1038
  %1531 = vmatpush.bf16.msra.mxu0 %v1034
  %1532 = vmatpush.bf16.msra.mxu0 %v1030
  %1533 = vmatpush.bf16.msra.mxu0 %v1026
  %1534 = vmatmul.bf16.gmra.mxu0 %v268
  %v1535 = vpop.f32.mrf.mxu0
  %v1536 = vadd.f32 %v1522, %v1535
  %v1537 = vpop.f32.mrf.mxu0
  %v1538 = vadd.f32 %v1524, %v1537
  %1539 = vdwg.mxu0
  %1540 = vmatpush.bf16.msra.mxu0 0
  %1541 = vmatpush.bf16.msra.mxu0 0
  %1542 = vmatpush.bf16.msra.mxu0 0
  %1543 = vmatpush.bf16.msra.mxu0 0
  %1544 = vmatpush.bf16.msra.mxu0 0
  %1545 = vmatpush.bf16.msra.mxu0 0
  %1546 = vmatpush.bf16.msra.mxu0 0
  %1547 = vmatpush.bf16.msra.mxu0 %v1058
  %1548 = vmatmul.bf16.gmra.mxu0 %v1258
  %v1549 = vpop.f32.mrf.mxu0
  %v1550 = vadd.f32 %v1536, %v1549
  %v1551 = vpop.f32.mrf.mxu0
  %v1552 = vadd.f32 %v1538, %v1551
  %1553 = vdwg.mxu0
  %1554 = vmatpush.bf16.msra.mxu0 %v895
  %1555 = vmatpush.bf16.msra.mxu0 %v891
  %1556 = vmatpush.bf16.msra.mxu0 %v887
  %1557 = vmatpush.bf16.msra.mxu0 %v883
  %1558 = vmatpush.bf16.msra.mxu0 %v879
  %1559 = vmatpush.bf16.msra.mxu0 %v875
  %1560 = vmatpush.bf16.msra.mxu0 %v871
  %1561 = vmatpush.bf16.msra.mxu0 %v867
  %1562 = vmatmul.bf16.gmra.mxu0 %v263
  %v1563 = vpop.f32.mrf.mxu0
  %v1564 = vadd.f32 %v236, %v1563
  %v1565 = vpop.f32.mrf.mxu0
  %v1566 = vadd.f32 %v236, %v1565
  %1567 = vdwg.mxu0
  %1568 = vmatpush.bf16.msra.mxu0 %v927
  %1569 = vmatpush.bf16.msra.mxu0 %v923
  %1570 = vmatpush.bf16.msra.mxu0 %v919
  %1571 = vmatpush.bf16.msra.mxu0 %v915
  %1572 = vmatpush.bf16.msra.mxu0 %v911
  %1573 = vmatpush.bf16.msra.mxu0 %v907
  %1574 = vmatpush.bf16.msra.mxu0 %v903
  %1575 = vmatpush.bf16.msra.mxu0 %v899
  %1576 = vmatmul.bf16.gmra.mxu0 %v264
  %v1577 = vpop.f32.mrf.mxu0
  %v1578 = vadd.f32 %v1564, %v1577
  %v1579 = vpop.f32.mrf.mxu0
  %v1580 = vadd.f32 %v1566, %v1579
  %1581 = vdwg.mxu0
  %1582 = vmatpush.bf16.msra.mxu0 %v959
  %1583 = vmatpush.bf16.msra.mxu0 %v955
  %1584 = vmatpush.bf16.msra.mxu0 %v951
  %1585 = vmatpush.bf16.msra.mxu0 %v947
  %1586 = vmatpush.bf16.msra.mxu0 %v943
  %1587 = vmatpush.bf16.msra.mxu0 %v939
  %1588 = vmatpush.bf16.msra.mxu0 %v935
  %1589 = vmatpush.bf16.msra.mxu0 %v931
  %1590 = vmatmul.bf16.gmra.mxu0 %v265
  %v1591 = vpop.f32.mrf.mxu0
  %v1592 = vadd.f32 %v1578, %v1591
  %v1593 = vpop.f32.mrf.mxu0
  %v1594 = vadd.f32 %v1580, %v1593
  %1595 = vdwg.mxu0
  %1596 = vmatpush.bf16.msra.mxu0 %v991
  %1597 = vmatpush.bf16.msra.mxu0 %v987
  %1598 = vmatpush.bf16.msra.mxu0 %v983
  %1599 = vmatpush.bf16.msra.mxu0 %v979
  %1600 = vmatpush.bf16.msra.mxu0 %v975
  %1601 = vmatpush.bf16.msra.mxu0 %v971
  %1602 = vmatpush.bf16.msra.mxu0 %v967
  %1603 = vmatpush.bf16.msra.mxu0 %v963
  %1604 = vmatmul.bf16.gmra.mxu0 %v266
  %v1605 = vpop.f32.mrf.mxu0
  %v1606 = vadd.f32 %v1592, %v1605
  %v1607 = vpop.f32.mrf.mxu0
  %v1608 = vadd.f32 %v1594, %v1607
  %1609 = vdwg.mxu0
  %1610 = vmatpush.bf16.msra.mxu0 %v1023
  %1611 = vmatpush.bf16.msra.mxu0 %v1019
  %1612 = vmatpush.bf16.msra.mxu0 %v1015
  %1613 = vmatpush.bf16.msra.mxu0 %v1011
  %1614 = vmatpush.bf16.msra.mxu0 %v1007
  %1615 = vmatpush.bf16.msra.mxu0 %v1003
  %1616 = vmatpush.bf16.msra.mxu0 %v999
  %1617 = vmatpush.bf16.msra.mxu0 %v995
  %1618 = vmatmul.bf16.gmra.mxu0 %v267
  %v1619 = vpop.f32.mrf.mxu0
  %v1620 = vadd.f32 %v1606, %v1619
  %v1621 = vpop.f32.mrf.mxu0
  %v1622 = vadd.f32 %v1608, %v1621
  %1623 = vdwg.mxu0
  %1624 = vmatpush.bf16.msra.mxu0 %v1055
  %1625 = vmatpush.bf16.msra.mxu0 %v1051
  %1626 = vmatpush.bf16.msra.mxu0 %v1047
  %1627 = vmatpush.bf16.msra.mxu0 %v1043
  %1628 = vmatpush.bf16.msra.mxu0 %v1039
  %1629 = vmatpush.bf16.msra.mxu0 %v1035
  %1630 = vmatpush.bf16.msra.mxu0 %v1031
  %1631 = vmatpush.bf16.msra.mxu0 %v1027
  %1632 = vmatmul.bf16.gmra.mxu0 %v268
  %v1633 = vpop.f32.mrf.mxu0
  %v1634 = vadd.f32 %v1620, %v1633
  %v1635 = vpop.f32.mrf.mxu0
  %v1636 = vadd.f32 %v1622, %v1635
  %1637 = vdwg.mxu0
  %1638 = vmatpush.bf16.msra.mxu0 0
  %1639 = vmatpush.bf16.msra.mxu0 0
  %1640 = vmatpush.bf16.msra.mxu0 0
  %1641 = vmatpush.bf16.msra.mxu0 0
  %1642 = vmatpush.bf16.msra.mxu0 0
  %1643 = vmatpush.bf16.msra.mxu0 0
  %1644 = vmatpush.bf16.msra.mxu0 0
  %1645 = vmatpush.bf16.msra.mxu0 %v1059
  %1646 = vmatmul.bf16.gmra.mxu0 %v1258
  %v1647 = vpop.f32.mrf.mxu0
  %v1648 = vadd.f32 %v1634, %v1647
  %v1649 = vpop.f32.mrf.mxu0
  %v1650 = vadd.f32 %v1636, %v1649
  %1651 = vdwg.mxu0
  %v1652 = vmax.f32 %v1354, 0.0
  %v1653 = vmax.f32 %v1452, 0.0
  %v1654 = vmax.f32 %v1550, 0.0
  %v1655 = vmax.f32 %v1648, 0.0
  %v1656 = vmax.f32 %v1356, 0.0
  %v1657 = vmax.f32 %v1454, 0.0
  %v1658 = vmax.f32 %v1552, 0.0
  %v1659 = vmax.f32 %v1650, 0.0
  %v1660 = vpack.c.bf16 %v1656, %v1652
  %v1661 = vpack.c.bf16 %v1657, %v1653
  %v1662 = vpack.c.bf16 %v1658, %v1654
  %v1663 = vpack.c.bf16 %v1659, %v1655
  %v1664 = vld [vmem:[%s2] sm:$0xff]
  %v1665 = vld [vmem:[%s2 + $0x8] sm:$0xff]
  %v1666 = vld [vmem:[%s2 + $0x10] sm:$0xff]
  %v1667 = vld [vmem:[%s2 + $0x18] sm:$0xff]
  %v1668 = vld [vmem:[%s2 + $0x20] sm:$0xff]
  %v1669 = vld [vmem:[%s2 + $0x28] sm:$0xff]
  %v1670 = vld [vmem:[%s2 + $0x30] sm:$0xff]
  %v1671 = vld [vmem:[%s2 + $0x38] sm:$0xff]
  %v1672 = vld [vmem:[%s2 + $0x40] sm:$0xff]
  %v1673 = vld [vmem:[%s2 + $0x48] sm:$0xff]
  %v1674 = vld [vmem:[%s2 + $0x50] sm:$0xff]
  %v1675 = vld [vmem:[%s2 + $0x58] sm:$0xff]
  %v1676 = vld [vmem:[%s2 + $0x60] sm:$0xff]
  %v1677 = vld [vmem:[%s2 + $0x68] sm:$0xff]
  %v1678 = vld [vmem:[%s2 + $0x70] sm:$0xff]
  %v1679 = vld [vmem:[%s2 + $0x78] sm:$0xff]
  %v1680 = vld [vmem:[%s2 + $0x80] sm:$0xff]
  %v1681 = vld [vmem:[%s2 + $0x88] sm:$0xff]
  %v1682 = vld [vmem:[%s2 + $0x90] sm:$0xff]
  %v1683 = vld [vmem:[%s2 + $0x98] sm:$0xff]
  %v1684 = vld [vmem:[%s2 + $0xa0] sm:$0xff]
  %v1685 = vld [vmem:[%s2 + $0xa8] sm:$0xff]
  %v1686 = vld [vmem:[%s2 + $0xb0] sm:$0xff]
  %v1687 = vld [vmem:[%s2 + $0xb8] sm:$0xff]
  %v1688 = vld [vmem:[%s2 + $0xc0] sm:$0xff]
  %v1689 = vld [vmem:[%s2 + $0xc8] sm:$0xff]
  %v1690 = vld [vmem:[%s2 + $0xd0] sm:$0xff]
  %v1691 = vld [vmem:[%s2 + $0xd8] sm:$0xff]
  %v1692 = vld [vmem:[%s2 + $0xe0] sm:$0xff]
  %v1693 = vld [vmem:[%s2 + $0xe8] sm:$0xff]
  %v1694 = vld [vmem:[%s2 + $0xf0] sm:$0xff]
  %v1695 = vld [vmem:[%s2 + $0xf8] sm:$0xff]
  %v1696 = vld [vmem:[%s2 + $0x100] sm:$0xff]
  %v1697 = vld [vmem:[%s2 + $0x108] sm:$0xff]
  %v1698 = vld [vmem:[%s2 + $0x110] sm:$0xff]
  %v1699 = vld [vmem:[%s2 + $0x118] sm:$0xff]
  %v1700 = vld [vmem:[%s2 + $0x120] sm:$0xff]
  %v1701 = vld [vmem:[%s2 + $0x128] sm:$0xff]
  %v1702 = vld [vmem:[%s2 + $0x130] sm:$0xff]
  %v1703 = vld [vmem:[%s2 + $0x138] sm:$0xff]
  %v1704 = vld [vmem:[%s2 + $0x140] sm:$0xff]
  %v1705 = vld [vmem:[%s2 + $0x148] sm:$0xff]
  %v1706 = vld [vmem:[%s2 + $0x150] sm:$0xff]
  %v1707 = vld [vmem:[%s2 + $0x158] sm:$0xff]
  %v1708 = vld [vmem:[%s2 + $0x160] sm:$0xff]
  %v1709 = vld [vmem:[%s2 + $0x168] sm:$0xff]
  %v1710 = vld [vmem:[%s2 + $0x170] sm:$0xff]
  %v1711 = vld [vmem:[%s2 + $0x178] sm:$0xff]
  %v1712 = vld [vmem:[%s2 + $0x180] sm:$0xff]
  %v1713 = vld [vmem:[%s2 + $0x188] sm:$0xff]
  %v1714 = vld [vmem:[%s2 + $0x190] sm:$0xff]
  %v1715 = vld [vmem:[%s2 + $0x198] sm:$0xff]
  %v1716 = vld [vmem:[%s2 + $0x1a0] sm:$0xff]
  %v1717 = vld [vmem:[%s2 + $0x1a8] sm:$0xff]
  %v1718 = vld [vmem:[%s2 + $0x1b0] sm:$0xff]
  %v1719 = vld [vmem:[%s2 + $0x1b8] sm:$0xff]
  %v1720 = vld [vmem:[%s2 + $0x1c0] sm:$0xff]
  %v1721 = vld [vmem:[%s2 + $0x1c8] sm:$0xff]
  %v1722 = vld [vmem:[%s2 + $0x1d0] sm:$0xff]
  %v1723 = vld [vmem:[%s2 + $0x1d8] sm:$0xff]
  %v1724 = vld [vmem:[%s2 + $0x1e0] sm:$0xff]
  %v1725 = vld [vmem:[%s2 + $0x1e8] sm:$0xff]
  %v1726 = vld [vmem:[%s2 + $0x1f0] sm:$0xff]
  %v1727 = vld [vmem:[%s2 + $0x1f8] sm:$0xff]
  %s1728 = scalar_lea.vmem %s6, 1
  %v1729 = vld [vmem:[%s1728] ss:$8 sm:$0x3]
  %v1731 = vperm.slane %v1729, 0
  %v1732 = vperm.slane %v1729, 1
  %v1799 = vunpack.c.l.b16 %v1664
  %v1800 = vunpack.c.h.b16 %v1664
  %v1801 = vunpack.c.l.b16 %v1665
  %v1802 = vunpack.c.h.b16 %v1665
  %v1803 = vunpack.c.l.b16 %v1666
  %v1804 = vunpack.c.h.b16 %v1666
  %v1805 = vunpack.c.l.b16 %v1667
  %v1806 = vunpack.c.h.b16 %v1667
  %v1807 = vunpack.c.l.b16 %v1668
  %v1808 = vunpack.c.h.b16 %v1668
  %v1809 = vunpack.c.l.b16 %v1669
  %v1810 = vunpack.c.h.b16 %v1669
  %v1811 = vunpack.c.l.b16 %v1670
  %v1812 = vunpack.c.h.b16 %v1670
  %v1813 = vunpack.c.l.b16 %v1671
  %v1814 = vunpack.c.h.b16 %v1671
  %v1815 = vunpack.c.l.b16 %v1672
  %v1816 = vunpack.c.h.b16 %v1672
  %v1817 = vunpack.c.l.b16 %v1673
  %v1818 = vunpack.c.h.b16 %v1673
  %v1819 = vunpack.c.l.b16 %v1674
  %v1820 = vunpack.c.h.b16 %v1674
  %v1821 = vunpack.c.l.b16 %v1675
  %v1822 = vunpack.c.h.b16 %v1675
  %v1823 = vunpack.c.l.b16 %v1676
  %v1824 = vunpack.c.h.b16 %v1676
  %v1825 = vunpack.c.l.b16 %v1677
  %v1826 = vunpack.c.h.b16 %v1677
  %v1827 = vunpack.c.l.b16 %v1678
  %v1828 = vunpack.c.h.b16 %v1678
  %v1829 = vunpack.c.l.b16 %v1679
  %v1830 = vunpack.c.h.b16 %v1679
  %v1831 = vunpack.c.l.b16 %v1680
  %v1832 = vunpack.c.h.b16 %v1680
  %v1833 = vunpack.c.l.b16 %v1681
  %v1834 = vunpack.c.h.b16 %v1681
  %v1835 = vunpack.c.l.b16 %v1682
  %v1836 = vunpack.c.h.b16 %v1682
  %v1837 = vunpack.c.l.b16 %v1683
  %v1838 = vunpack.c.h.b16 %v1683
  %v1839 = vunpack.c.l.b16 %v1684
  %v1840 = vunpack.c.h.b16 %v1684
  %v1841 = vunpack.c.l.b16 %v1685
  %v1842 = vunpack.c.h.b16 %v1685
  %v1843 = vunpack.c.l.b16 %v1686
  %v1844 = vunpack.c.h.b16 %v1686
  %v1845 = vunpack.c.l.b16 %v1687
  %v1846 = vunpack.c.h.b16 %v1687
  %v1847 = vunpack.c.l.b16 %v1688
  %v1848 = vunpack.c.h.b16 %v1688
  %v1849 = vunpack.c.l.b16 %v1689
  %v1850 = vunpack.c.h.b16 %v1689
  %v1851 = vunpack.c.l.b16 %v1690
  %v1852 = vunpack.c.h.b16 %v1690
  %v1853 = vunpack.c.l.b16 %v1691
  %v1854 = vunpack.c.h.b16 %v1691
  %v1855 = vunpack.c.l.b16 %v1692
  %v1856 = vunpack.c.h.b16 %v1692
  %v1857 = vunpack.c.l.b16 %v1693
  %v1858 = vunpack.c.h.b16 %v1693
  %v1859 = vunpack.c.l.b16 %v1694
  %v1860 = vunpack.c.h.b16 %v1694
  %v1861 = vunpack.c.l.b16 %v1695
  %v1862 = vunpack.c.h.b16 %v1695
  %v1863 = vunpack.c.l.b16 %v1696
  %v1864 = vunpack.c.h.b16 %v1696
  %v1865 = vunpack.c.l.b16 %v1697
  %v1866 = vunpack.c.h.b16 %v1697
  %v1867 = vunpack.c.l.b16 %v1698
  %v1868 = vunpack.c.h.b16 %v1698
  %v1869 = vunpack.c.l.b16 %v1699
  %v1870 = vunpack.c.h.b16 %v1699
  %v1871 = vunpack.c.l.b16 %v1700
  %v1872 = vunpack.c.h.b16 %v1700
  %v1873 = vunpack.c.l.b16 %v1701
  %v1874 = vunpack.c.h.b16 %v1701
  %v1875 = vunpack.c.l.b16 %v1702
  %v1876 = vunpack.c.h.b16 %v1702
  %v1877 = vunpack.c.l.b16 %v1703
  %v1878 = vunpack.c.h.b16 %v1703
  %v1879 = vunpack.c.l.b16 %v1704
  %v1880 = vunpack.c.h.b16 %v1704
  %v1881 = vunpack.c.l.b16 %v1705
  %v1882 = vunpack.c.h.b16 %v1705
  %v1883 = vunpack.c.l.b16 %v1706
  %v1884 = vunpack.c.h.b16 %v1706
  %v1885 = vunpack.c.l.b16 %v1707
  %v1886 = vunpack.c.h.b16 %v1707
  %v1887 = vunpack.c.l.b16 %v1708
  %v1888 = vunpack.c.h.b16 %v1708
  %v1889 = vunpack.c.l.b16 %v1709
  %v1890 = vunpack.c.h.b16 %v1709
  %v1891 = vunpack.c.l.b16 %v1710
  %v1892 = vunpack.c.h.b16 %v1710
  %v1893 = vunpack.c.l.b16 %v1711
  %v1894 = vunpack.c.h.b16 %v1711
  %v1895 = vunpack.c.l.b16 %v1712
  %v1896 = vunpack.c.h.b16 %v1712
  %v1897 = vunpack.c.l.b16 %v1713
  %v1898 = vunpack.c.h.b16 %v1713
  %v1899 = vunpack.c.l.b16 %v1714
  %v1900 = vunpack.c.h.b16 %v1714
  %v1901 = vunpack.c.l.b16 %v1715
  %v1902 = vunpack.c.h.b16 %v1715
  %v1903 = vunpack.c.l.b16 %v1716
  %v1904 = vunpack.c.h.b16 %v1716
  %v1905 = vunpack.c.l.b16 %v1717
  %v1906 = vunpack.c.h.b16 %v1717
  %v1907 = vunpack.c.l.b16 %v1718
  %v1908 = vunpack.c.h.b16 %v1718
  %v1909 = vunpack.c.l.b16 %v1719
  %v1910 = vunpack.c.h.b16 %v1719
  %v1911 = vunpack.c.l.b16 %v1720
  %v1912 = vunpack.c.h.b16 %v1720
  %v1913 = vunpack.c.l.b16 %v1721
  %v1914 = vunpack.c.h.b16 %v1721
  %v1915 = vunpack.c.l.b16 %v1722
  %v1916 = vunpack.c.h.b16 %v1722
  %v1917 = vunpack.c.l.b16 %v1723
  %v1918 = vunpack.c.h.b16 %v1723
  %v1919 = vunpack.c.l.b16 %v1724
  %v1920 = vunpack.c.h.b16 %v1724
  %v1921 = vunpack.c.l.b16 %v1725
  %v1922 = vunpack.c.h.b16 %v1725
  %v1923 = vunpack.c.l.b16 %v1726
  %v1924 = vunpack.c.h.b16 %v1726
  %v1925 = vunpack.c.l.b16 %v1727
  %v1926 = vunpack.c.h.b16 %v1727
  %v1927 = vpack.c.b16 %v1801, %v1799
  %v1928 = vpack.c.b16 %v1802, %v1800
  %v1929 = vpack.c.b16 %v1805, %v1803
  %v1930 = vpack.c.b16 %v1806, %v1804
  %v1931 = vpack.c.b16 %v1809, %v1807
  %v1932 = vpack.c.b16 %v1810, %v1808
  %v1933 = vpack.c.b16 %v1813, %v1811
  %v1934 = vpack.c.b16 %v1814, %v1812
  %v1935 = vpack.c.b16 %v1817, %v1815
  %v1936 = vpack.c.b16 %v1818, %v1816
  %v1937 = vpack.c.b16 %v1821, %v1819
  %v1938 = vpack.c.b16 %v1822, %v1820
  %v1939 = vpack.c.b16 %v1825, %v1823
  %v1940 = vpack.c.b16 %v1826, %v1824
  %v1941 = vpack.c.b16 %v1829, %v1827
  %v1942 = vpack.c.b16 %v1830, %v1828
  %v1943 = vpack.c.b16 %v1833, %v1831
  %v1944 = vpack.c.b16 %v1834, %v1832
  %v1945 = vpack.c.b16 %v1837, %v1835
  %v1946 = vpack.c.b16 %v1838, %v1836
  %v1947 = vpack.c.b16 %v1841, %v1839
  %v1948 = vpack.c.b16 %v1842, %v1840
  %v1949 = vpack.c.b16 %v1845, %v1843
  %v1950 = vpack.c.b16 %v1846, %v1844
  %v1951 = vpack.c.b16 %v1849, %v1847
  %v1952 = vpack.c.b16 %v1850, %v1848
  %v1953 = vpack.c.b16 %v1853, %v1851
  %v1954 = vpack.c.b16 %v1854, %v1852
  %v1955 = vpack.c.b16 %v1857, %v1855
  %v1956 = vpack.c.b16 %v1858, %v1856
  %v1957 = vpack.c.b16 %v1861, %v1859
  %v1958 = vpack.c.b16 %v1862, %v1860
  %v1959 = vpack.c.b16 %v1865, %v1863
  %v1960 = vpack.c.b16 %v1866, %v1864
  %v1961 = vpack.c.b16 %v1869, %v1867
  %v1962 = vpack.c.b16 %v1870, %v1868
  %v1963 = vpack.c.b16 %v1873, %v1871
  %v1964 = vpack.c.b16 %v1874, %v1872
  %v1965 = vpack.c.b16 %v1877, %v1875
  %v1966 = vpack.c.b16 %v1878, %v1876
  %v1967 = vpack.c.b16 %v1881, %v1879
  %v1968 = vpack.c.b16 %v1882, %v1880
  %v1969 = vpack.c.b16 %v1885, %v1883
  %v1970 = vpack.c.b16 %v1886, %v1884
  %v1971 = vpack.c.b16 %v1889, %v1887
  %v1972 = vpack.c.b16 %v1890, %v1888
  %v1973 = vpack.c.b16 %v1893, %v1891
  %v1974 = vpack.c.b16 %v1894, %v1892
  %v1975 = vpack.c.b16 %v1897, %v1895
  %v1976 = vpack.c.b16 %v1898, %v1896
  %v1977 = vpack.c.b16 %v1901, %v1899
  %v1978 = vpack.c.b16 %v1902, %v1900
  %v1979 = vpack.c.b16 %v1905, %v1903
  %v1980 = vpack.c.b16 %v1906, %v1904
  %v1981 = vpack.c.b16 %v1909, %v1907
  %v1982 = vpack.c.b16 %v1910, %v1908
  %v1983 = vpack.c.b16 %v1913, %v1911
  %v1984 = vpack.c.b16 %v1914, %v1912
  %v1985 = vpack.c.b16 %v1917, %v1915
  %v1986 = vpack.c.b16 %v1918, %v1916
  %v1987 = vpack.c.b16 %v1921, %v1919
  %v1988 = vpack.c.b16 %v1922, %v1920
  %v1989 = vpack.c.b16 %v1925, %v1923
  %v1990 = vpack.c.b16 %v1926, %v1924
  %2055 = vmatpush.bf16.msra.mxu0 %v1941
  %2056 = vmatpush.bf16.msra.mxu0 %v1939
  %2057 = vmatpush.bf16.msra.mxu0 %v1937
  %2058 = vmatpush.bf16.msra.mxu0 %v1935
  %2059 = vmatpush.bf16.msra.mxu0 %v1933
  %2060 = vmatpush.bf16.msra.mxu0 %v1931
  %2061 = vmatpush.bf16.msra.mxu0 %v1929
  %2062 = vmatpush.bf16.msra.mxu0 %v1927
  %2063 = vmatmul.bf16.gmra.mxu0 %v1660
  %v2064 = vpop.f32.mrf.mxu0
  %v2065 = vadd.f32 %v1731, %v2064
  %v2066 = vpop.f32.mrf.mxu0
  %v2067 = vadd.f32 %v1731, %v2066
  %2068 = vdwg.mxu0
  %2069 = vmatpush.bf16.msra.mxu0 %v1957
  %2070 = vmatpush.bf16.msra.mxu0 %v1955
  %2071 = vmatpush.bf16.msra.mxu0 %v1953
  %2072 = vmatpush.bf16.msra.mxu0 %v1951
  %2073 = vmatpush.bf16.msra.mxu0 %v1949
  %2074 = vmatpush.bf16.msra.mxu0 %v1947
  %2075 = vmatpush.bf16.msra.mxu0 %v1945
  %2076 = vmatpush.bf16.msra.mxu0 %v1943
  %2077 = vmatmul.bf16.gmra.mxu0 %v1661
  %v2078 = vpop.f32.mrf.mxu0
  %v2079 = vadd.f32 %v2065, %v2078
  %v2080 = vpop.f32.mrf.mxu0
  %v2081 = vadd.f32 %v2067, %v2080
  %2082 = vdwg.mxu0
  %2083 = vmatpush.bf16.msra.mxu0 %v1973
  %2084 = vmatpush.bf16.msra.mxu0 %v1971
  %2085 = vmatpush.bf16.msra.mxu0 %v1969
  %2086 = vmatpush.bf16.msra.mxu0 %v1967
  %2087 = vmatpush.bf16.msra.mxu0 %v1965
  %2088 = vmatpush.bf16.msra.mxu0 %v1963
  %2089 = vmatpush.bf16.msra.mxu0 %v1961
  %2090 = vmatpush.bf16.msra.mxu0 %v1959
  %2091 = vmatmul.bf16.gmra.mxu0 %v1662
  %v2092 = vpop.f32.mrf.mxu0
  %v2093 = vadd.f32 %v2079, %v2092
  %v2094 = vpop.f32.mrf.mxu0
  %v2095 = vadd.f32 %v2081, %v2094
  %2096 = vdwg.mxu0
  %2097 = vmatpush.bf16.msra.mxu0 %v1989
  %2098 = vmatpush.bf16.msra.mxu0 %v1987
  %2099 = vmatpush.bf16.msra.mxu0 %v1985
  %2100 = vmatpush.bf16.msra.mxu0 %v1983
  %2101 = vmatpush.bf16.msra.mxu0 %v1981
  %2102 = vmatpush.bf16.msra.mxu0 %v1979
  %2103 = vmatpush.bf16.msra.mxu0 %v1977
  %2104 = vmatpush.bf16.msra.mxu0 %v1975
  %2105 = vmatmul.bf16.gmra.mxu0 %v1663
  %v2106 = vpop.f32.mrf.mxu0
  %v2107 = vadd.f32 %v2093, %v2106
  %v2108 = vpop.f32.mrf.mxu0
  %v2109 = vadd.f32 %v2095, %v2108
  %2110 = vdwg.mxu0
  %2111 = vmatpush.bf16.msra.mxu0 %v1942
  %2112 = vmatpush.bf16.msra.mxu0 %v1940
  %2113 = vmatpush.bf16.msra.mxu0 %v1938
  %2114 = vmatpush.bf16.msra.mxu0 %v1936
  %2115 = vmatpush.bf16.msra.mxu0 %v1934
  %2116 = vmatpush.bf16.msra.mxu0 %v1932
  %2117 = vmatpush.bf16.msra.mxu0 %v1930
  %2118 = vmatpush.bf16.msra.mxu0 %v1928
  %2119 = vmatmul.bf16.gmra.mxu0 %v1660
  %v2120 = vpop.f32.mrf.mxu0
  %v2121 = vadd.f32 %v1732, %v2120
  %v2122 = vpop.f32.mrf.mxu0
  %v2123 = vadd.f32 %v1732, %v2122
  %2124 = vdwg.mxu0
  %2125 = vmatpush.bf16.msra.mxu0 %v1958
  %2126 = vmatpush.bf16.msra.mxu0 %v1956
  %2127 = vmatpush.bf16.msra.mxu0 %v1954
  %2128 = vmatpush.bf16.msra.mxu0 %v1952
  %2129 = vmatpush.bf16.msra.mxu0 %v1950
  %2130 = vmatpush.bf16.msra.mxu0 %v1948
  %2131 = vmatpush.bf16.msra.mxu0 %v1946
  %2132 = vmatpush.bf16.msra.mxu0 %v1944
  %2133 = vmatmul.bf16.gmra.mxu0 %v1661
  %v2134 = vpop.f32.mrf.mxu0
  %v2135 = vadd.f32 %v2121, %v2134
  %v2136 = vpop.f32.mrf.mxu0
  %v2137 = vadd.f32 %v2123, %v2136
  %2138 = vdwg.mxu0
  %2139 = vmatpush.bf16.msra.mxu0 %v1974
  %2140 = vmatpush.bf16.msra.mxu0 %v1972
  %2141 = vmatpush.bf16.msra.mxu0 %v1970
  %2142 = vmatpush.bf16.msra.mxu0 %v1968
  %2143 = vmatpush.bf16.msra.mxu0 %v1966
  %2144 = vmatpush.bf16.msra.mxu0 %v1964
  %2145 = vmatpush.bf16.msra.mxu0 %v1962
  %2146 = vmatpush.bf16.msra.mxu0 %v1960
  %2147 = vmatmul.bf16.gmra.mxu0 %v1662
  %v2148 = vpop.f32.mrf.mxu0
  %v2149 = vadd.f32 %v2135, %v2148
  %v2150 = vpop.f32.mrf.mxu0
  %v2151 = vadd.f32 %v2137, %v2150
  %2152 = vdwg.mxu0
  %2153 = vmatpush.bf16.msra.mxu0 %v1990
  %2154 = vmatpush.bf16.msra.mxu0 %v1988
  %2155 = vmatpush.bf16.msra.mxu0 %v1986
  %2156 = vmatpush.bf16.msra.mxu0 %v1984
  %2157 = vmatpush.bf16.msra.mxu0 %v1982
  %2158 = vmatpush.bf16.msra.mxu0 %v1980
  %2159 = vmatpush.bf16.msra.mxu0 %v1978
  %2160 = vmatpush.bf16.msra.mxu0 %v1976
  %2161 = vmatmul.bf16.gmra.mxu0 %v1663
  %v2162 = vpop.f32.mrf.mxu0
  %v2163 = vadd.f32 %v2149, %v2162
  %v2164 = vpop.f32.mrf.mxu0
  %v2165 = vadd.f32 %v2151, %v2164
  %2166 = vdwg.mxu0
  %v2167 = vmax.f32 %v2107, 0.0
  %v2168 = vmax.f32 %v2163, 0.0
  %v2169 = vmax.f32 %v2109, 0.0
  %v2170 = vmax.f32 %v2165, 0.0
  %v2171 = vpack.c.bf16 %v2169, %v2167
  %v2172 = vpack.c.bf16 %v2170, %v2168
  %v2173 = vld [vmem:[%s3] sm:$0xff]
  %v2174 = vld [vmem:[%s3 + $0x8] sm:$0xff]
  %v2175 = vld [vmem:[%s3 + $0x10] sm:$0xff]
  %v2176 = vld [vmem:[%s3 + $0x18] sm:$0xff]
  %v2177 = vld [vmem:[%s3 + $0x20] sm:$0xff]
  %v2178 = vld [vmem:[%s3 + $0x28] sm:$0xff]
  %v2179 = vld [vmem:[%s3 + $0x30] sm:$0xff]
  %v2180 = vld [vmem:[%s3 + $0x38] sm:$0xff]
  %v2181 = vld [vmem:[%s3 + $0x40] sm:$0xff]
  %v2182 = vld [vmem:[%s3 + $0x48] sm:$0xff]
  %v2183 = vld [vmem:[%s3 + $0x50] sm:$0xff]
  %v2184 = vld [vmem:[%s3 + $0x58] sm:$0xff]
  %v2185 = vld [vmem:[%s3 + $0x60] sm:$0xff]
  %v2186 = vld [vmem:[%s3 + $0x68] sm:$0xff]
  %v2187 = vld [vmem:[%s3 + $0x70] sm:$0xff]
  %v2188 = vld [vmem:[%s3 + $0x78] sm:$0xff]
  %v2189 = vld [vmem:[%s3 + $0x80] sm:$0xff]
  %v2190 = vld [vmem:[%s3 + $0x88] sm:$0xff]
  %v2191 = vld [vmem:[%s3 + $0x90] sm:$0xff]
  %v2192 = vld [vmem:[%s3 + $0x98] sm:$0xff]
  %v2193 = vld [vmem:[%s3 + $0xa0] sm:$0xff]
  %v2194 = vld [vmem:[%s3 + $0xa8] sm:$0xff]
  %v2195 = vld [vmem:[%s3 + $0xb0] sm:$0xff]
  %v2196 = vld [vmem:[%s3 + $0xb8] sm:$0xff]
  %v2197 = vld [vmem:[%s3 + $0xc0] sm:$0xff]
  %v2198 = vld [vmem:[%s3 + $0xc8] sm:$0xff]
  %v2199 = vld [vmem:[%s3 + $0xd0] sm:$0xff]
  %v2200 = vld [vmem:[%s3 + $0xd8] sm:$0xff]
  %v2201 = vld [vmem:[%s3 + $0xe0] sm:$0xff]
  %v2202 = vld [vmem:[%s3 + $0xe8] sm:$0xff]
  %v2203 = vld [vmem:[%s3 + $0xf0] sm:$0xff]
  %v2204 = vld [vmem:[%s3 + $0xf8] sm:$0xff]
  %s2205 = scalar_lea.vmem %s6, 2
  %v2206 = vld [vmem:[%s2205] ss:$8 sm:$0x3]
  %v2208 = vperm.slane %v2206, 0
  %v2209 = vperm.slane %v2206, 1
  %v2244 = vunpack.c.l.b16 %v2173
  %v2245 = vunpack.c.h.b16 %v2173
  %v2246 = vunpack.c.l.b16 %v2174
  %v2247 = vunpack.c.h.b16 %v2174
  %v2248 = vunpack.c.l.b16 %v2175
  %v2249 = vunpack.c.h.b16 %v2175
  %v2250 = vunpack.c.l.b16 %v2176
  %v2251 = vunpack.c.h.b16 %v2176
  %v2252 = vunpack.c.l.b16 %v2177
  %v2253 = vunpack.c.h.b16 %v2177
  %v2254 = vunpack.c.l.b16 %v2178
  %v2255 = vunpack.c.h.b16 %v2178
  %v2256 = vunpack.c.l.b16 %v2179
  %v2257 = vunpack.c.h.b16 %v2179
  %v2258 = vunpack.c.l.b16 %v2180
  %v2259 = vunpack.c.h.b16 %v2180
  %v2260 = vunpack.c.l.b16 %v2181
  %v2261 = vunpack.c.h.b16 %v2181
  %v2262 = vunpack.c.l.b16 %v2182
  %v2263 = vunpack.c.h.b16 %v2182
  %v2264 = vunpack.c.l.b16 %v2183
  %v2265 = vunpack.c.h.b16 %v2183
  %v2266 = vunpack.c.l.b16 %v2184
  %v2267 = vunpack.c.h.b16 %v2184
  %v2268 = vunpack.c.l.b16 %v2185
  %v2269 = vunpack.c.h.b16 %v2185
  %v2270 = vunpack.c.l.b16 %v2186
  %v2271 = vunpack.c.h.b16 %v2186
  %v2272 = vunpack.c.l.b16 %v2187
  %v2273 = vunpack.c.h.b16 %v2187
  %v2274 = vunpack.c.l.b16 %v2188
  %v2275 = vunpack.c.h.b16 %v2188
  %v2276 = vunpack.c.l.b16 %v2189
  %v2277 = vunpack.c.h.b16 %v2189
  %v2278 = vunpack.c.l.b16 %v2190
  %v2279 = vunpack.c.h.b16 %v2190
  %v2280 = vunpack.c.l.b16 %v2191
  %v2281 = vunpack.c.h.b16 %v2191
  %v2282 = vunpack.c.l.b16 %v2192
  %v2283 = vunpack.c.h.b16 %v2192
  %v2284 = vunpack.c.l.b16 %v2193
  %v2285 = vunpack.c.h.b16 %v2193
  %v2286 = vunpack.c.l.b16 %v2194
  %v2287 = vunpack.c.h.b16 %v2194
  %v2288 = vunpack.c.l.b16 %v2195
  %v2289 = vunpack.c.h.b16 %v2195
  %v2290 = vunpack.c.l.b16 %v2196
  %v2291 = vunpack.c.h.b16 %v2196
  %v2292 = vunpack.c.l.b16 %v2197
  %v2293 = vunpack.c.h.b16 %v2197
  %v2294 = vunpack.c.l.b16 %v2198
  %v2295 = vunpack.c.h.b16 %v2198
  %v2296 = vunpack.c.l.b16 %v2199
  %v2297 = vunpack.c.h.b16 %v2199
  %v2298 = vunpack.c.l.b16 %v2200
  %v2299 = vunpack.c.h.b16 %v2200
  %v2300 = vunpack.c.l.b16 %v2201
  %v2301 = vunpack.c.h.b16 %v2201
  %v2302 = vunpack.c.l.b16 %v2202
  %v2303 = vunpack.c.h.b16 %v2202
  %v2304 = vunpack.c.l.b16 %v2203
  %v2305 = vunpack.c.h.b16 %v2203
  %v2306 = vunpack.c.l.b16 %v2204
  %v2307 = vunpack.c.h.b16 %v2204
  %v2308 = vpack.c.b16 %v2246, %v2244
  %v2309 = vpack.c.b16 %v2247, %v2245
  %v2310 = vpack.c.b16 %v2250, %v2248
  %v2311 = vpack.c.b16 %v2251, %v2249
  %v2312 = vpack.c.b16 %v2254, %v2252
  %v2313 = vpack.c.b16 %v2255, %v2253
  %v2314 = vpack.c.b16 %v2258, %v2256
  %v2315 = vpack.c.b16 %v2259, %v2257
  %v2316 = vpack.c.b16 %v2262, %v2260
  %v2317 = vpack.c.b16 %v2263, %v2261
  %v2318 = vpack.c.b16 %v2266, %v2264
  %v2319 = vpack.c.b16 %v2267, %v2265
  %v2320 = vpack.c.b16 %v2270, %v2268
  %v2321 = vpack.c.b16 %v2271, %v2269
  %v2322 = vpack.c.b16 %v2274, %v2272
  %v2323 = vpack.c.b16 %v2275, %v2273
  %v2324 = vpack.c.b16 %v2278, %v2276
  %v2325 = vpack.c.b16 %v2279, %v2277
  %v2326 = vpack.c.b16 %v2282, %v2280
  %v2327 = vpack.c.b16 %v2283, %v2281
  %v2328 = vpack.c.b16 %v2286, %v2284
  %v2329 = vpack.c.b16 %v2287, %v2285
  %v2330 = vpack.c.b16 %v2290, %v2288
  %v2331 = vpack.c.b16 %v2291, %v2289
  %v2332 = vpack.c.b16 %v2294, %v2292
  %v2333 = vpack.c.b16 %v2295, %v2293
  %v2334 = vpack.c.b16 %v2298, %v2296
  %v2335 = vpack.c.b16 %v2299, %v2297
  %v2336 = vpack.c.b16 %v2302, %v2300
  %v2337 = vpack.c.b16 %v2303, %v2301
  %v2338 = vpack.c.b16 %v2306, %v2304
  %v2339 = vpack.c.b16 %v2307, %v2305
  %2372 = vmatpush.bf16.msra.mxu0 %v2322
  %2373 = vmatpush.bf16.msra.mxu0 %v2320
  %2374 = vmatpush.bf16.msra.mxu0 %v2318
  %2375 = vmatpush.bf16.msra.mxu0 %v2316
  %2376 = vmatpush.bf16.msra.mxu0 %v2314
  %2377 = vmatpush.bf16.msra.mxu0 %v2312
  %2378 = vmatpush.bf16.msra.mxu0 %v2310
  %2379 = vmatpush.bf16.msra.mxu0 %v2308
  %2380 = vmatmul.bf16.gmra.mxu0 %v2171
  %v2381 = vpop.f32.mrf.mxu0
  %v2382 = vadd.f32 %v2208, %v2381
  %v2383 = vpop.f32.mrf.mxu0
  %v2384 = vadd.f32 %v2208, %v2383
  %2385 = vdwg.mxu0
  %2386 = vmatpush.bf16.msra.mxu0 %v2338
  %2387 = vmatpush.bf16.msra.mxu0 %v2336
  %2388 = vmatpush.bf16.msra.mxu0 %v2334
  %2389 = vmatpush.bf16.msra.mxu0 %v2332
  %2390 = vmatpush.bf16.msra.mxu0 %v2330
  %2391 = vmatpush.bf16.msra.mxu0 %v2328
  %2392 = vmatpush.bf16.msra.mxu0 %v2326
  %2393 = vmatpush.bf16.msra.mxu0 %v2324
  %2394 = vmatmul.bf16.gmra.mxu0 %v2172
  %v2395 = vpop.f32.mrf.mxu0
  %v2396 = vadd.f32 %v2382, %v2395
  %v2397 = vpop.f32.mrf.mxu0
  %v2398 = vadd.f32 %v2384, %v2397
  %2399 = vdwg.mxu0
  %2400 = vmatpush.bf16.msra.mxu0 %v2323
  %2401 = vmatpush.bf16.msra.mxu0 %v2321
  %2402 = vmatpush.bf16.msra.mxu0 %v2319
  %2403 = vmatpush.bf16.msra.mxu0 %v2317
  %2404 = vmatpush.bf16.msra.mxu0 %v2315
  %2405 = vmatpush.bf16.msra.mxu0 %v2313
  %2406 = vmatpush.bf16.msra.mxu0 %v2311
  %2407 = vmatpush.bf16.msra.mxu0 %v2309
  %2408 = vmatmul.bf16.gmra.mxu0 %v2171
  %v2409 = vpop.f32.mrf.mxu0
  %v2410 = vadd.f32 %v2209, %v2409
  %v2411 = vpop.f32.mrf.mxu0
  %v2412 = vadd.f32 %v2209, %v2411
  %2413 = vdwg.mxu0
  %2414 = vmatpush.bf16.msra.mxu0 %v2339
  %2415 = vmatpush.bf16.msra.mxu0 %v2337
  %2416 = vmatpush.bf16.msra.mxu0 %v2335
  %2417 = vmatpush.bf16.msra.mxu0 %v2333
  %2418 = vmatpush.bf16.msra.mxu0 %v2331
  %2419 = vmatpush.bf16.msra.mxu0 %v2329
  %2420 = vmatpush.bf16.msra.mxu0 %v2327
  %2421 = vmatpush.bf16.msra.mxu0 %v2325
  %2422 = vmatmul.bf16.gmra.mxu0 %v2172
  %v2423 = vpop.f32.mrf.mxu0
  %v2424 = vadd.f32 %v2410, %v2423
  %v2425 = vpop.f32.mrf.mxu0
  %v2426 = vadd.f32 %v2412, %v2425
  %2427 = vdwg.mxu0
  %v2428 = vmax.f32 %v2396, 0.0
  %v2429 = vmax.f32 %v2424, 0.0
  %v2430 = vmax.f32 %v2398, 0.0
  %v2431 = vmax.f32 %v2426, 0.0
  %v2432 = vpack.c.bf16 %v2430, %v2428
  %v2433 = vpack.c.bf16 %v2431, %v2429
  %v2434 = vld [vmem:[%s4] sm:$0xf]
  %v2435 = vld [vmem:[%s4 + $0x4] sm:$0xf]
  %v2436 = vld [vmem:[%s4 + $0x8] sm:$0xf]
  %v2437 = vld [vmem:[%s4 + $0xc] sm:$0xf]
  %v2438 = vld [vmem:[%s4 + $0x10] sm:$0xf]
  %v2439 = vld [vmem:[%s4 + $0x14] sm:$0xf]
  %v2440 = vld [vmem:[%s4 + $0x18] sm:$0xf]
  %v2441 = vld [vmem:[%s4 + $0x1c] sm:$0xf]
  %v2442 = vld [vmem:[%s4 + $0x20] sm:$0xf]
  %v2443 = vld [vmem:[%s4 + $0x24] sm:$0xf]
  %v2444 = vld [vmem:[%s4 + $0x28] sm:$0xf]
  %v2445 = vld [vmem:[%s4 + $0x2c] sm:$0xf]
  %v2446 = vld [vmem:[%s4 + $0x30] sm:$0xf]
  %v2447 = vld [vmem:[%s4 + $0x34] sm:$0xf]
  %v2448 = vld [vmem:[%s4 + $0x38] sm:$0xf]
  %v2449 = vld [vmem:[%s4 + $0x3c] sm:$0xf]
  %v2450 = vld [vmem:[%s4 + $0x40] sm:$0xf]
  %v2451 = vld [vmem:[%s4 + $0x44] sm:$0xf]
  %v2452 = vld [vmem:[%s4 + $0x48] sm:$0xf]
  %v2453 = vld [vmem:[%s4 + $0x4c] sm:$0xf]
  %v2454 = vld [vmem:[%s4 + $0x50] sm:$0xf]
  %v2455 = vld [vmem:[%s4 + $0x54] sm:$0xf]
  %v2456 = vld [vmem:[%s4 + $0x58] sm:$0xf]
  %v2457 = vld [vmem:[%s4 + $0x5c] sm:$0xf]
  %v2458 = vld [vmem:[%s4 + $0x60] sm:$0xf]
  %v2459 = vld [vmem:[%s4 + $0x64] sm:$0xf]
  %v2460 = vld [vmem:[%s4 + $0x68] sm:$0xf]
  %v2461 = vld [vmem:[%s4 + $0x6c] sm:$0xf]
  %v2462 = vld [vmem:[%s4 + $0x70] sm:$0xf]
  %v2463 = vld [vmem:[%s4 + $0x74] sm:$0xf]
  %v2464 = vld [vmem:[%s4 + $0x78] sm:$0xf]
  %v2465 = vld [vmem:[%s4 + $0x7c] sm:$0xf]
  %v2466 = vld [vmem:[%s6 + $0x3] ss:$0 sm:$0xff]
  %v2499 = vunpack.c.l.b16 %v2434
  %v2500 = vunpack.c.l.b16 %v2435
  %v2501 = vunpack.c.l.b16 %v2436
  %v2502 = vunpack.c.l.b16 %v2437
  %v2503 = vunpack.c.l.b16 %v2438
  %v2504 = vunpack.c.l.b16 %v2439
  %v2505 = vunpack.c.l.b16 %v2440
  %v2506 = vunpack.c.l.b16 %v2441
  %v2507 = vunpack.c.l.b16 %v2442
  %v2508 = vunpack.c.l.b16 %v2443
  %v2509 = vunpack.c.l.b16 %v2444
  %v2510 = vunpack.c.l.b16 %v2445
  %v2511 = vunpack.c.l.b16 %v2446
  %v2512 = vunpack.c.l.b16 %v2447
  %v2513 = vunpack.c.l.b16 %v2448
  %v2514 = vunpack.c.l.b16 %v2449
  %v2515 = vunpack.c.l.b16 %v2450
  %v2516 = vunpack.c.l.b16 %v2451
  %v2517 = vunpack.c.l.b16 %v2452
  %v2518 = vunpack.c.l.b16 %v2453
  %v2519 = vunpack.c.l.b16 %v2454
  %v2520 = vunpack.c.l.b16 %v2455
  %v2521 = vunpack.c.l.b16 %v2456
  %v2522 = vunpack.c.l.b16 %v2457
  %v2523 = vunpack.c.l.b16 %v2458
  %v2524 = vunpack.c.l.b16 %v2459
  %v2525 = vunpack.c.l.b16 %v2460
  %v2526 = vunpack.c.l.b16 %v2461
  %v2527 = vunpack.c.l.b16 %v2462
  %v2528 = vunpack.c.l.b16 %v2463
  %v2529 = vunpack.c.l.b16 %v2464
  %v2530 = vunpack.c.l.b16 %v2465
  %v2531 = vpack.c.b16 %v2500, %v2499
  %v2532 = vpack.c.b16 %v2502, %v2501
  %v2533 = vpack.c.b16 %v2504, %v2503
  %v2534 = vpack.c.b16 %v2506, %v2505
  %v2535 = vpack.c.b16 %v2508, %v2507
  %v2536 = vpack.c.b16 %v2510, %v2509
  %v2537 = vpack.c.b16 %v2512, %v2511
  %v2538 = vpack.c.b16 %v2514, %v2513
  %v2539 = vpack.c.b16 %v2516, %v2515
  %v2540 = vpack.c.b16 %v2518, %v2517
  %v2541 = vpack.c.b16 %v2520, %v2519
  %v2542 = vpack.c.b16 %v2522, %v2521
  %v2543 = vpack.c.b16 %v2524, %v2523
  %v2544 = vpack.c.b16 %v2526, %v2525
  %v2545 = vpack.c.b16 %v2528, %v2527
  %v2546 = vpack.c.b16 %v2530, %v2529
  %2563 = vmatpush.bf16.msra.mxu0 %v2538
  %2564 = vmatpush.bf16.msra.mxu0 %v2537
  %2565 = vmatpush.bf16.msra.mxu0 %v2536
  %2566 = vmatpush.bf16.msra.mxu0 %v2535
  %2567 = vmatpush.bf16.msra.mxu0 %v2534
  %2568 = vmatpush.bf16.msra.mxu0 %v2533
  %2569 = vmatpush.bf16.msra.mxu0 %v2532
  %2570 = vmatpush.bf16.msra.mxu0 %v2531
  %2571 = vmatmul.bf16.gmra.mxu0 %v2432
  %v2572 = vpop.f32.mrf.mxu0
  %v2573 = vadd.f32 %v2466, %v2572
  %v2574 = vpop.f32.mrf.mxu0
  %v2575 = vadd.f32 %v2466, %v2574
  %2576 = vdwg.mxu0
  %2577 = vmatpush.bf16.msra.mxu0 %v2546
  %2578 = vmatpush.bf16.msra.mxu0 %v2545
  %2579 = vmatpush.bf16.msra.mxu0 %v2544
  %2580 = vmatpush.bf16.msra.mxu0 %v2543
  %2581 = vmatpush.bf16.msra.mxu0 %v2542
  %2582 = vmatpush.bf16.msra.mxu0 %v2541
  %2583 = vmatpush.bf16.msra.mxu0 %v2540
  %2584 = vmatpush.bf16.msra.mxu0 %v2539
  %2585 = vmatmul.bf16.gmra.mxu0 %v2433
  %v2586 = vpop.f32.mrf.mxu0
  %v2587 = vadd.f32 %v2573, %v2586
  %v2588 = vpop.f32.mrf.mxu0
  %v2589 = vadd.f32 %v2575, %v2588
  %2590 = vdwg.mxu0
  %v2591 = vmax.f32 %v2587, 0.0
  %v2592 = vmax.f32 %v2589, 0.0
  %v2593 = vpack.c.bf16 %v2592, %v2591
  %v2594 = vld [vmem:[%s5] sm:$0xf]
  %v2595 = vld [vmem:[%s5 + $0x4] sm:$0xf]
  %v2596 = vld [vmem:[%s5 + $0x8] sm:$0xf]
  %v2597 = vld [vmem:[%s5 + $0xc] sm:$0xf]
  %v2598 = vld [vmem:[%s5 + $0x10] sm:$0xf]
  %v2599 = vld [vmem:[%s5 + $0x14] sm:$0xf]
  %v2600 = vld [vmem:[%s5 + $0x18] sm:$0xf]
  %v2601 = vld [vmem:[%s5 + $0x1c] sm:$0xf]
  %v2602 = vld [vmem:[%s5 + $0x20] sm:$0xf]
  %v2603 = vld [vmem:[%s5 + $0x24] sm:$0xf]
  %v2604 = vld [vmem:[%s5 + $0x28] sm:$0xf]
  %v2605 = vld [vmem:[%s5 + $0x2c] sm:$0xf]
  %v2606 = vld [vmem:[%s5 + $0x30] sm:$0xf]
  %v2607 = vld [vmem:[%s5 + $0x34] sm:$0xf]
  %v2608 = vld [vmem:[%s5 + $0x38] sm:$0xf]
  %v2609 = vld [vmem:[%s5 + $0x3c] sm:$0xf]
  %v2610 = vld [vmem:[%s6 + $0x4] ss:$0 sm:$0xff]
  %v2627 = vunpack.c.l.b16 %v2594
  %v2628 = vunpack.c.l.b16 %v2595
  %v2629 = vunpack.c.l.b16 %v2596
  %v2630 = vunpack.c.l.b16 %v2597
  %v2631 = vunpack.c.l.b16 %v2598
  %v2632 = vunpack.c.l.b16 %v2599
  %v2633 = vunpack.c.l.b16 %v2600
  %v2634 = vunpack.c.l.b16 %v2601
  %v2635 = vunpack.c.l.b16 %v2602
  %v2636 = vunpack.c.l.b16 %v2603
  %v2637 = vunpack.c.l.b16 %v2604
  %v2638 = vunpack.c.l.b16 %v2605
  %v2639 = vunpack.c.l.b16 %v2606
  %v2640 = vunpack.c.l.b16 %v2607
  %v2641 = vunpack.c.l.b16 %v2608
  %v2642 = vunpack.c.l.b16 %v2609
  %v2643 = vpack.c.b16 %v2628, %v2627
  %v2644 = vpack.c.b16 %v2630, %v2629
  %v2645 = vpack.c.b16 %v2632, %v2631
  %v2646 = vpack.c.b16 %v2634, %v2633
  %v2647 = vpack.c.b16 %v2636, %v2635
  %v2648 = vpack.c.b16 %v2638, %v2637
  %v2649 = vpack.c.b16 %v2640, %v2639
  %v2650 = vpack.c.b16 %v2642, %v2641
  %2659 = vmatpush.bf16.msra.mxu0 %v2650
  %2660 = vmatpush.bf16.msra.mxu0 %v2649
  %2661 = vmatpush.bf16.msra.mxu0 %v2648
  %2662 = vmatpush.bf16.msra.mxu0 %v2647
  %2663 = vmatpush.bf16.msra.mxu0 %v2646
  %2664 = vmatpush.bf16.msra.mxu0 %v2645
  %2665 = vmatpush.bf16.msra.mxu0 %v2644
  %2666 = vmatpush.bf16.msra.mxu0 %v2643
  %2667 = vmatmul.bf16.gmra.mxu0 %v2593
  %v2668 = vpop.f32.mrf.mxu0
  %v2669 = vadd.f32 %v2610, %v2668
  %v2670 = vpop.f32.mrf.mxu0
  %v2671 = vadd.f32 %v2610, %v2670
  %2672 = vdwg.mxu0
  %2673 = vst [vmem:[%s7] sm:$0xff] %v2669
  %2674 = vst [vmem:[%s7 + $0x8] sm:$0xff] %v2671
  // Predicated region
  $region30: #{base_network_forward.1} parent=0 // pred_check
    _
  $region31: #{base_network_forward.1} parent=0 // pred_check_branch
    %2676 = sbr.rel (0) target = $region33
  $region32: #{base_network_forward.1} parent=0 // pred_region
    _
  $region33: #{base_network_forward.1} parent=0 // pred_fallthru
    _
  // Predicated region
  $region34: #{base_network_forward.1} parent=0 // pred_check
    _
  $region35: #{base_network_forward.1} parent=0 // pred_check_branch
    %2678 = sbr.rel (0) target = $region37
  $region36: #{base_network_forward.1} parent=0 // pred_region
    _
  $region37: #{base_network_forward.1} parent=0 // pred_fallthru
    _

</llo_original>
